<compile_context>
chip_gen: v7x
topology: tpu7x:2x2x1
jax: 0.10.0
libtpu: 0.0.40
codegen_flags: <defaults>
</compile_context>

<pallas_src>
import jax
import jax.numpy as jnp
from jax.experimental import pallas as pl
from jax.experimental.pallas import tpu as pltpu


def _shift2d(v, dy, dx):
    """v: (H, W, P).  Returns out with out[h, w] = v[h + dy, w + dx],
    zero where the source index is out of range ('same' padding)."""
    H, W, P = v.shape
    if dy < 0:
        v = jnp.concatenate(
            [jnp.zeros((-dy, W, P), v.dtype), v[: H + dy]], axis=0)
    elif dy > 0:
        v = jnp.concatenate(
            [v[dy:], jnp.zeros((dy, W, P), v.dtype)], axis=0)
    if dx < 0:
        v = jnp.concatenate(
            [jnp.zeros((H, -dx, P), v.dtype), v[:, : W + dx]], axis=1)
    elif dx > 0:
        v = jnp.concatenate(
            [v[:, dx:], jnp.zeros((H, dx, P), v.dtype)], axis=1)
    return v


def fire_block_kernel(x_ref, w_sq_ref, w_cat_ref, b_cat_ref, out_ref):
    # x_ref:     (H, W, Cin)        one image per grid step (grid over N)
    # w_sq_ref:  (Cin, P)           squeeze 1x1 weights (no bias)
    # w_cat_ref: (9*P, Cout_pad)    fused [expand1x1 | expand3x3 | pad] weights
    # b_cat_ref: (1, Cout_pad)      fused bias
    # out_ref:   (H*W, Cout_pad)    post-ReLU, lane-dense (pad sliced off outside)
    H, W, Cin = x_ref.shape
    P = w_sq_ref.shape[1]

    # ---- squeeze (1x1 conv, no bias) + ReLU: one matmul over all pixels ----
    x2d = x_ref[...].reshape(H * W, Cin)
    s = jnp.maximum(
        jnp.dot(x2d, w_sq_ref[...], preferred_element_type=jnp.float32), 0.0)

    # ---- im2col of the squeezed map for the 3x3 taps (padding=1) ----------
    # expand1x1 lives in the centre-tap rows of w_cat, so a single matmul
    # yields the full concatenated output.
    s3 = s.reshape(H, W, P)
    pieces = [_shift2d(s3, ky - 1, kx - 1)
              for ky in range(3) for kx in range(3)]
    cols = jnp.concatenate(pieces, axis=-1).reshape(H * W, 9 * P)

    y = jnp.dot(cols, w_cat_ref[...], preferred_element_type=jnp.float32)
    out_ref[...] = jnp.maximum(y + b_cat_ref[...], 0.0)


def fire_block(x_nchw, w_sq, w_e1, b_e1, w_e3, b_e3):
    """x_nchw: (N, Cin, H, W) float32.  Returns (N, 2*F, H, W)."""
    N, Cin, H, W = x_nchw.shape
    P = w_sq.shape[1]
    F = w_e1.shape[1]
    Cout = 2 * F
    Cout_pad = ((Cout + 127) // 128) * 128   # lane-dense output stores

    # NHWC inside the kernel.
    # TODO(synk): keep the surrounding network NHWC to drop these two
    # transposes (each is a full extra HBM pass) when chaining fire modules.
    x_nhwc = jnp.transpose(x_nchw, (0, 2, 3, 1)).astype(jnp.float32)

    # Fused weight: tap t = ky*3+kx occupies rows [t*P, (t+1)*P).
    #   columns [0, F)    : expand1x1 (centre tap only)
    #   columns [F, 2F)   : expand3x3 tap (ky, kx)
    #   columns [2F, pad) : zeros
    w_cat = jnp.zeros((9 * P, Cout_pad), jnp.float32)
    for ky in range(3):
        for kx in range(3):
            t = ky * 3 + kx
            w_cat = w_cat.at[t * P:(t + 1) * P, F:2 * F].set(
                w_e3[ky, kx].astype(jnp.float32))
    w_cat = w_cat.at[4 * P:5 * P, :F].set(w_e1.astype(jnp.float32))

    b_cat = jnp.zeros((1, Cout_pad), jnp.float32)
    b_cat = b_cat.at[0, :F].set(b_e1.astype(jnp.float32))
    b_cat = b_cat.at[0, F:2 * F].set(b_e3.astype(jnp.float32))

    out2d = pl.pallas_call(
        fire_block_kernel,
        out_shape=jax.ShapeDtypeStruct((N, H * W, Cout_pad), jnp.float32),
        grid=(N,),
        in_specs=[
            pl.BlockSpec((None, H, W, Cin), lambda n: (n, 0, 0, 0)),
            pl.BlockSpec((Cin, P), lambda n: (0, 0)),
            pl.BlockSpec((9 * P, Cout_pad), lambda n: (0, 0)),
            pl.BlockSpec((1, Cout_pad), lambda n: (0, 0)),
        ],
        out_specs=pl.BlockSpec((None, H * W, Cout_pad), lambda n: (n, 0, 0)),
        compiler_params=pltpu.CompilerParams(
            dimension_semantics=("parallel",),
            vmem_limit_bytes=48 * 1024 * 1024,
        ),
    )(x_nhwc, w_sq.astype(jnp.float32), w_cat, b_cat)

    out_nhwc = out2d[:, :, :Cout].reshape(N, H, W, Cout)
    return jnp.transpose(out_nhwc, (0, 3, 1, 2))


def fire_block_reference(x, w_sq, w_e1, b_e1, w_e3, b_e3):
    """Pure-JAX NCHW reference mirroring the PyTorch module semantics."""
    w_sq_oihw = jnp.transpose(w_sq, (1, 0))[:, :, None, None]        # (P,Cin,1,1)
    s = jax.lax.conv_general_dilated(x, w_sq_oihw, (1, 1), 'VALID')
    s = jnp.maximum(s, 0.0)
    w_e1_oihw = jnp.transpose(w_e1, (1, 0))[:, :, None, None]        # (F,P,1,1)
    y1 = jax.lax.conv_general_dilated(s, w_e1_oihw, (1, 1), 'VALID')
    y1 = y1 + b_e1[None, :, None, None]
    w_e3_oihw = jnp.transpose(w_e3, (3, 2, 0, 1))                    # (F,P,3,3)
    y3 = jax.lax.conv_general_dilated(s, w_e3_oihw, (1, 1),
                                      ((1, 1), (1, 1)))
    y3 = y3 + b_e3[None, :, None, None]
    return jnp.maximum(jnp.concatenate([y1, y3], axis=1), 0.0)


if __name__ == "__main__":
    # FireBlock(inp=4, oup=16): planes = 16 // 8 = 2, each expand = 16 // 2 = 8
    N, Cin, H, W = 2, 4, 16, 16
    oup = 16
    P = oup // 8
    F = oup // 2

    key = jax.random.PRNGKey(0)
    kx, k1, k2, k3, k4, k5 = jax.random.split(key, 6)

    x = jax.random.normal(kx, (N, Cin, H, W), dtype=jnp.float32)
    # weights stored in (in, out) / (kh, kw, in, out) matmul layout
    w_sq = 0.3 * jax.random.normal(k1, (Cin, P), dtype=jnp.float32)
    w_e1 = 0.3 * jax.random.normal(k2, (P, F), dtype=jnp.float32)
    b_e1 = 0.1 * jax.random.normal(k3, (F,), dtype=jnp.float32)
    w_e3 = 0.3 * jax.random.normal(k4, (3, 3, P, F), dtype=jnp.float32)
    b_e3 = 0.1 * jax.random.normal(k5, (F,), dtype=jnp.float32)

    fire = jax.jit(fire_block)
    out = jax.block_until_ready(fire(x, w_sq, w_e1, b_e1, w_e3, b_e3))

    ref = jax.block_until_ready(
        fire_block_reference(x, w_sq, w_e1, b_e1, w_e3, b_e3))

    assert out.shape == (N, oup, H, W), out.shape
    assert jnp.allclose(out, ref, rtol=2e-2, atol=2e-2), (
        float(jnp.max(jnp.abs(out - ref))))

    print("KERNEL_OK")
</pallas_src>

<mosaic_0001>
module attributes {stable_mosaic.version = 11 : i64} {
  func.func @fire_block_kernel(%arg0: i32, %arg1: memref<1x16x16x4xf32, #tpu.memory_space<vmem>>, %arg2: memref<4x2xf32, #tpu.memory_space<vmem>>, %arg3: memref<18x128xf32, #tpu.memory_space<vmem>>, %arg4: memref<1x128xf32, #tpu.memory_space<vmem>>, %arg5: memref<1x256x128xf32, #tpu.memory_space<vmem>>) attributes {dimension_semantics = [#tpu.dimension_semantics<parallel>], iteration_bounds = array<i64: 2>, scalar_prefetch = 0 : i64, scratch_operands = 0 : i64, tpu.core_type = #tpu.core_type<tc>, window_params = [{transform_indices = @transform_0, window_bounds = array<i64: 1, 16, 16, 4>}, {pipeline_mode = #tpu.pipeline_mode<synchronous>, transform_indices = @transform_1, window_bounds = array<i64: 4, 2>}, {pipeline_mode = #tpu.pipeline_mode<synchronous>, transform_indices = @transform_2, window_bounds = array<i64: 18, 128>}, {pipeline_mode = #tpu.pipeline_mode<synchronous>, transform_indices = @transform_3, window_bounds = array<i64: 1, 128>}, {transform_indices = @transform_4, window_bounds = array<i64: 1, 256, 128>}]} {
    %c0 = arith.constant 0 : index
    %c0_0 = arith.constant 0 : index
    %c0_1 = arith.constant 0 : index
    %c0_2 = arith.constant 0 : index
    %0 = vector.load %arg1[%c0, %c0_0, %c0_1, %c0_2] : memref<1x16x16x4xf32, #tpu.memory_space<vmem>>, vector<1x16x16x4xf32>
    %1 = vector.shape_cast %0 : vector<1x16x16x4xf32> to vector<16x16x4xf32>
    %2 = vector.shape_cast %1 : vector<16x16x4xf32> to vector<256x4xf32>
    %c0_3 = arith.constant 0 : index
    %c0_4 = arith.constant 0 : index
    %3 = vector.load %arg2[%c0_3, %c0_4] : memref<4x2xf32, #tpu.memory_space<vmem>>, vector<4x2xf32>
    %cst = arith.constant dense<0.000000e+00> : vector<256x2xf32>
    %4 = tpu.matmul %2, %3, %cst {dimension_numbers = #tpu.dot_dimension_numbers<[1], [0], [0], [1], [0, 0, 1, 1], [], []>} : vector<256x4xf32>, vector<4x2xf32>, vector<256x2xf32> -> vector<256x2xf32>
    %cst_5 = arith.constant 0.000000e+00 : f32
    %5 = vector.broadcast %cst_5 : f32 to vector<256x2xf32>
    %6 = arith.maximumf %4, %5 : vector<256x2xf32>
    %7 = vector.shape_cast %6 : vector<256x2xf32> to vector<16x16x2xf32>
    %cst_6 = arith.constant 0.000000e+00 : f32
    %8 = vector.broadcast %cst_6 : f32 to vector<1x16x2xf32>
    %9 = vector.extract_strided_slice %7 {offsets = [0, 0, 0], sizes = [15, 16, 2], strides = [1, 1, 1]} : vector<16x16x2xf32> to vector<15x16x2xf32>
    %10 = tpu.concatenate %8, %9 in 0 : vector<1x16x2xf32>, vector<15x16x2xf32> -> vector<16x16x2xf32>
    %cst_7 = arith.constant 0.000000e+00 : f32
    %11 = vector.broadcast %cst_7 : f32 to vector<16x1x2xf32>
    %12 = vector.extract_strided_slice %10 {offsets = [0, 0, 0], sizes = [16, 15, 2], strides = [1, 1, 1]} : vector<16x16x2xf32> to vector<16x15x2xf32>
    %13 = tpu.concatenate %11, %12 in 1 : vector<16x1x2xf32>, vector<16x15x2xf32> -> vector<16x16x2xf32>
    %cst_8 = arith.constant 0.000000e+00 : f32
    %14 = vector.broadcast %cst_8 : f32 to vector<1x16x2xf32>
    %15 = vector.extract_strided_slice %7 {offsets = [0, 0, 0], sizes = [15, 16, 2], strides = [1, 1, 1]} : vector<16x16x2xf32> to vector<15x16x2xf32>
    %16 = tpu.concatenate %14, %15 in 0 : vector<1x16x2xf32>, vector<15x16x2xf32> -> vector<16x16x2xf32>
    %cst_9 = arith.constant 0.000000e+00 : f32
    %17 = vector.broadcast %cst_9 : f32 to vector<1x16x2xf32>
    %18 = vector.extract_strided_slice %7 {offsets = [0, 0, 0], sizes = [15, 16, 2], strides = [1, 1, 1]} : vector<16x16x2xf32> to vector<15x16x2xf32>
    %19 = tpu.concatenate %17, %18 in 0 : vector<1x16x2xf32>, vector<15x16x2xf32> -> vector<16x16x2xf32>
    %20 = vector.extract_strided_slice %19 {offsets = [0, 1, 0], sizes = [16, 15, 2], strides = [1, 1, 1]} : vector<16x16x2xf32> to vector<16x15x2xf32>
    %cst_10 = arith.constant 0.000000e+00 : f32
    %21 = vector.broadcast %cst_10 : f32 to vector<16x1x2xf32>
    %22 = tpu.concatenate %20, %21 in 1 : vector<16x15x2xf32>, vector<16x1x2xf32> -> vector<16x16x2xf32>
    %cst_11 = arith.constant 0.000000e+00 : f32
    %23 = vector.broadcast %cst_11 : f32 to vector<16x1x2xf32>
    %24 = vector.extract_strided_slice %7 {offsets = [0, 0, 0], sizes = [16, 15, 2], strides = [1, 1, 1]} : vector<16x16x2xf32> to vector<16x15x2xf32>
    %25 = tpu.concatenate %23, %24 in 1 : vector<16x1x2xf32>, vector<16x15x2xf32> -> vector<16x16x2xf32>
    %26 = vector.extract_strided_slice %7 {offsets = [0, 1, 0], sizes = [16, 15, 2], strides = [1, 1, 1]} : vector<16x16x2xf32> to vector<16x15x2xf32>
    %cst_12 = arith.constant 0.000000e+00 : f32
    %27 = vector.broadcast %cst_12 : f32 to vector<16x1x2xf32>
    %28 = tpu.concatenate %26, %27 in 1 : vector<16x15x2xf32>, vector<16x1x2xf32> -> vector<16x16x2xf32>
    %29 = vector.extract_strided_slice %7 {offsets = [1, 0, 0], sizes = [15, 16, 2], strides = [1, 1, 1]} : vector<16x16x2xf32> to vector<15x16x2xf32>
    %cst_13 = arith.constant 0.000000e+00 : f32
    %30 = vector.broadcast %cst_13 : f32 to vector<1x16x2xf32>
    %31 = tpu.concatenate %29, %30 in 0 : vector<15x16x2xf32>, vector<1x16x2xf32> -> vector<16x16x2xf32>
    %cst_14 = arith.constant 0.000000e+00 : f32
    %32 = vector.broadcast %cst_14 : f32 to vector<16x1x2xf32>
    %33 = vector.extract_strided_slice %31 {offsets = [0, 0, 0], sizes = [16, 15, 2], strides = [1, 1, 1]} : vector<16x16x2xf32> to vector<16x15x2xf32>
    %34 = tpu.concatenate %32, %33 in 1 : vector<16x1x2xf32>, vector<16x15x2xf32> -> vector<16x16x2xf32>
    %35 = vector.extract_strided_slice %7 {offsets = [1, 0, 0], sizes = [15, 16, 2], strides = [1, 1, 1]} : vector<16x16x2xf32> to vector<15x16x2xf32>
    %cst_15 = arith.constant 0.000000e+00 : f32
    %36 = vector.broadcast %cst_15 : f32 to vector<1x16x2xf32>
    %37 = tpu.concatenate %35, %36 in 0 : vector<15x16x2xf32>, vector<1x16x2xf32> -> vector<16x16x2xf32>
    %38 = vector.extract_strided_slice %7 {offsets = [1, 0, 0], sizes = [15, 16, 2], strides = [1, 1, 1]} : vector<16x16x2xf32> to vector<15x16x2xf32>
    %cst_16 = arith.constant 0.000000e+00 : f32
    %39 = vector.broadcast %cst_16 : f32 to vector<1x16x2xf32>
    %40 = tpu.concatenate %38, %39 in 0 : vector<15x16x2xf32>, vector<1x16x2xf32> -> vector<16x16x2xf32>
    %41 = vector.extract_strided_slice %40 {offsets = [0, 1, 0], sizes = [16, 15, 2], strides = [1, 1, 1]} : vector<16x16x2xf32> to vector<16x15x2xf32>
    %cst_17 = arith.constant 0.000000e+00 : f32
    %42 = vector.broadcast %cst_17 : f32 to vector<16x1x2xf32>
    %43 = tpu.concatenate %41, %42 in 1 : vector<16x15x2xf32>, vector<16x1x2xf32> -> vector<16x16x2xf32>
    %44 = tpu.concatenate %13, %16, %22, %25, %7, %28, %34, %37, %43 in 2 : vector<16x16x2xf32>, vector<16x16x2xf32>, vector<16x16x2xf32>, vector<16x16x2xf32>, vector<16x16x2xf32>, vector<16x16x2xf32>, vector<16x16x2xf32>, vector<16x16x2xf32>, vector<16x16x2xf32> -> vector<16x16x18xf32>
    %45 = vector.shape_cast %44 : vector<16x16x18xf32> to vector<256x18xf32>
    %c0_18 = arith.constant 0 : index
    %c0_19 = arith.constant 0 : index
    %46 = vector.load %arg3[%c0_18, %c0_19] : memref<18x128xf32, #tpu.memory_space<vmem>>, vector<18x128xf32>
    %cst_20 = arith.constant dense<0.000000e+00> : vector<256x128xf32>
    %47 = tpu.matmul %45, %46, %cst_20 {dimension_numbers = #tpu.dot_dimension_numbers<[1], [0], [0], [1], [0, 0, 1, 1], [], []>} : vector<256x18xf32>, vector<18x128xf32>, vector<256x128xf32> -> vector<256x128xf32>
    %c0_21 = arith.constant 0 : index
    %c0_22 = arith.constant 0 : index
    %48 = vector.load %arg4[%c0_21, %c0_22] : memref<1x128xf32, #tpu.memory_space<vmem>>, vector<1x128xf32>
    %49 = vector.broadcast %48 : vector<1x128xf32> to vector<256x128xf32>
    %50 = arith.addf %47, %49 : vector<256x128xf32>
    %cst_23 = arith.constant 0.000000e+00 : f32
    %51 = vector.broadcast %cst_23 : f32 to vector<256x128xf32>
    %52 = arith.maximumf %50, %51 : vector<256x128xf32>
    %c0_24 = arith.constant 0 : index
    %c0_25 = arith.constant 0 : index
    %c0_26 = arith.constant 0 : index
    %53 = vector.load %arg5[%c0_24, %c0_25, %c0_26] : memref<1x256x128xf32, #tpu.memory_space<vmem>>, vector<1x256x128xf32>
    %54 = vector.shape_cast %53 : vector<1x256x128xf32> to vector<256x128xf32>
    %55 = vector.shape_cast %52 : vector<256x128xf32> to vector<1x256x128xf32>
    tpu.vector_store %arg5[%c0_24, %c0_25, %c0_26], %55 {strides = array<i32>} : memref<1x256x128xf32, #tpu.memory_space<vmem>>, vector<1x256x128xf32>,
    return
  }
  func.func @transform_0(%arg0: i32) -> (i32, i32, i32, i32) {
    %c0_i32 = arith.constant 0 : i32
    %c0_i32_0 = arith.constant 0 : i32
    %c0_i32_1 = arith.constant 0 : i32
    %c0_i32_2 = arith.constant 0 : i32
    return %arg0, %c0_i32, %c0_i32_0, %c0_i32_1 : i32, i32, i32, i32
  }
  func.func @transform_1(%arg0: i32) -> (i32, i32) {
    %c0_i32 = arith.constant 0 : i32
    %c0_i32_0 = arith.constant 0 : i32
    %c0_i32_1 = arith.constant 0 : i32
    return %c0_i32, %c0_i32_0 : i32, i32
  }
  func.func @transform_2(%arg0: i32) -> (i32, i32) {
    %c0_i32 = arith.constant 0 : i32
    %c0_i32_0 = arith.constant 0 : i32
    %c0_i32_1 = arith.constant 0 : i32
    return %c0_i32, %c0_i32_0 : i32, i32
  }
  func.func @transform_3(%arg0: i32) -> (i32, i32) {
    %c0_i32 = arith.constant 0 : i32
    %c0_i32_0 = arith.constant 0 : i32
    %c0_i32_1 = arith.constant 0 : i32
    return %c0_i32, %c0_i32_0 : i32, i32
  }
  func.func @transform_4(%arg0: i32) -> (i32, i32, i32) {
    %c0_i32 = arith.constant 0 : i32
    %c0_i32_0 = arith.constant 0 : i32
    %c0_i32_1 = arith.constant 0 : i32
    return %arg0, %c0_i32, %c0_i32_0 : i32, i32, i32
  }
}

</mosaic_0001>

<llo_original>
// kernel: fire_block.1
$region0: #{fire_block.1}
  #allocation0 [shape = 'u32[]', space=smem, size = 0x4, offset = 0x4, fixed_abs, tag = 'smem constant byte address 0x4 - core index']
  #allocation1 [shape = 'u32[144,128]{1,0:T(1,128)}', space=vmem, size = 0x12000, scoped, tag = 'internal scratch']
  %s0 = inlined_call_operand.vmem [shape: f32[2,16,16,4], index: 0, kind: input, shape index: {}]
  %s1 = inlined_call_operand.vmem [shape: f32[4,2], index: 1, kind: input, shape index: {}]
  %s2 = inlined_call_operand.vmem [shape: f32[18,128], index: 2, kind: input, shape index: {}]
  %s3 = inlined_call_operand.vmem [shape: f32[1,128], index: 3, kind: input, shape index: {}]
  %s4 = inlined_call_operand.vmem [shape: f32[2,256,128], index: 4, kind: output, shape index: {}]
  %s5 = sld [smem:[#allocation0]]
  $region49: #{fire_block.1} parent=0
    _
  %s7 = ssub.s32 1, %s5
  %s8 = scalar_select 0, %s7, %s5
  loop: start=0, step=1, limit=4
  $region2: #{fire_block.1} parent=0 // loop_pre_header
    _
  $region3: #{fire_block.1} parent=0 // loop_header
    %s10 = sphi 0, %s14
    %p11 = scmp.ge.s32.totalorder %s10, 4
    %s20 = sphi 0, %s22
    %s23 = sphi 0, %s20
    %s24 = sphi 0, %s23
    %s40 = sphi 0, %s24
    %s44 = sphi 0, %s44
    %s46 = sphi 0, %s44
    %s47 = sphi 0, %s46
    %s61 = sphi 0, %s47
    %s65 = sphi 0, %s65
    %s67 = sphi 0, %s65
    %s68 = sphi 0, %s67
    %s82 = sphi 0, %s68
    %s86 = sphi 0, %s86
    %s88 = sphi 0, %s86
    %s89 = sphi 0, %s88
    %s103 = sphi 0, %s89
    %s109 = sphi 0, %s111
    %s112 = sphi 0, %s109
    %s113 = sphi 0, %s112
    %s129 = sphi 0, %s113
  $region4: #{fire_block.1} parent=0 // loop_header_branch
    %13 = sbr.rel (%p11) target = $region8
  $region5: #{fire_block.1} parent=0 // loop_body
    %s15 = ssub.s32 %s10, 1
    %s16 = ssub.s32 %s10, 2
    %s17 = sadd.s32 %s10, 1
    %s18 = ssub.s32 %s10, %s17
    %p19 = scmp.eq.s32.totalorder %s18, 0
    %s21 = sadd.s32 %s20, 1
    %s22 = scalar_select %p19, %s20, %s21
    %p25 = pneg %p19
    %p26 = scmp.eq.s32.totalorder %s10, 1
    %p27 = por %p25, %p26
    %p28 = scmp.ne.s32.totalorder %s20, %s23
    %p29 = scmp.eq.s32.totalorder %s10, 0
    %p30 = por %p28, %p29
    %p31 = scmp.ne.s32.totalorder %s20, %s23
    %p32 = scmp.eq.s32.totalorder %s15, 1
    %p33 = por %p31, %p32
    %p34 = scmp.ne.s32.totalorder %s23, %s24
    %p35 = scmp.eq.s32.totalorder %s15, 0
    %p36 = por %p34, %p35
    %p37 = scmp.ne.s32.totalorder %s23, %s24
    %p38 = scmp.eq.s32.totalorder %s16, 1
    %p39 = por %p37, %p38
    %p41 = scmp.ne.s32.totalorder %s24, %s40
    %p42 = scmp.eq.s32.totalorder %s16, 0
    %p43 = por %p41, %p42
    %s45 = sadd.s32 %s44, 1
    %p48 = scmp.eq.s32.totalorder %s10, 1
    %p49 = scmp.ne.s32.totalorder %s44, %s46
    %p50 = scmp.eq.s32.totalorder %s10, 0
    %p51 = por %p49, %p50
    %p52 = scmp.ne.s32.totalorder %s44, %s46
    %p53 = scmp.eq.s32.totalorder %s15, 1
    %p54 = por %p52, %p53
    %p55 = scmp.ne.s32.totalorder %s46, %s47
    %p56 = scmp.eq.s32.totalorder %s15, 0
    %p57 = por %p55, %p56
    %p58 = scmp.ne.s32.totalorder %s46, %s47
    %p59 = scmp.eq.s32.totalorder %s16, 1
    %p60 = por %p58, %p59
    %p62 = scmp.ne.s32.totalorder %s47, %s61
    %p63 = scmp.eq.s32.totalorder %s16, 0
    %p64 = por %p62, %p63
    %s66 = sadd.s32 %s65, 1
    %p69 = scmp.eq.s32.totalorder %s10, 1
    %p70 = scmp.ne.s32.totalorder %s65, %s67
    %p71 = scmp.eq.s32.totalorder %s10, 0
    %p72 = por %p70, %p71
    %p73 = scmp.ne.s32.totalorder %s65, %s67
    %p74 = scmp.eq.s32.totalorder %s15, 1
    %p75 = por %p73, %p74
    %p76 = scmp.ne.s32.totalorder %s67, %s68
    %p77 = scmp.eq.s32.totalorder %s15, 0
    %p78 = por %p76, %p77
    %p79 = scmp.ne.s32.totalorder %s67, %s68
    %p80 = scmp.eq.s32.totalorder %s16, 1
    %p81 = por %p79, %p80
    %p83 = scmp.ne.s32.totalorder %s68, %s82
    %p84 = scmp.eq.s32.totalorder %s16, 0
    %p85 = por %p83, %p84
    %s87 = sadd.s32 %s86, 1
    %p90 = scmp.eq.s32.totalorder %s10, 1
    %p91 = scmp.ne.s32.totalorder %s86, %s88
    %p92 = scmp.eq.s32.totalorder %s10, 0
    %p93 = por %p91, %p92
    %p94 = scmp.ne.s32.totalorder %s86, %s88
    %p95 = scmp.eq.s32.totalorder %s15, 1
    %p96 = por %p94, %p95
    %p97 = scmp.ne.s32.totalorder %s88, %s89
    %p98 = scmp.eq.s32.totalorder %s15, 0
    %p99 = por %p97, %p98
    %p100 = scmp.ne.s32.totalorder %s88, %s89
    %p101 = scmp.eq.s32.totalorder %s16, 1
    %p102 = por %p100, %p101
    %p104 = scmp.ne.s32.totalorder %s89, %s103
    %p105 = scmp.eq.s32.totalorder %s16, 0
    %p106 = por %p104, %p105
    %s107 = ssub.s32 %s10, %s17
    %p108 = scmp.eq.s32.totalorder %s107, 0
    %s110 = sadd.s32 %s109, 1
    %s111 = scalar_select %p108, %s109, %s110
    %p114 = pneg %p108
    %p115 = scmp.eq.s32.totalorder %s10, 1
    %p116 = por %p114, %p115
    %p117 = scmp.ne.s32.totalorder %s109, %s112
    %p118 = scmp.eq.s32.totalorder %s10, 0
    %p119 = por %p117, %p118
    %p120 = scmp.ne.s32.totalorder %s109, %s112
    %p121 = scmp.eq.s32.totalorder %s15, 1
    %p122 = por %p120, %p121
    %p123 = scmp.ne.s32.totalorder %s112, %s113
    %p124 = scmp.eq.s32.totalorder %s15, 0
    %p125 = por %p123, %p124
    %p126 = scmp.ne.s32.totalorder %s112, %s113
    %p127 = scmp.eq.s32.totalorder %s16, 1
    %p128 = por %p126, %p127
    %p130 = scmp.ne.s32.totalorder %s113, %s129
    %p131 = scmp.eq.s32.totalorder %s16, 0
    %p132 = por %p130, %p131
    %p133 = scmp.le.s32.totalorder 1, %s10
    %p134 = scmp.lt.s32.totalorder %s10, 3
    %p135 = pnand %p133, %p134
    %p136 = pneg %p135
    // Predicated region
    $region9: #{fire_block.1} parent=5 // pred_check
      _
    $region10: #{fire_block.1} parent=5 // pred_check_branch
      %138 = sbr.rel (%p135) target = $region12
    $region11: #{fire_block.1} parent=5 // pred_region
      %s139 = ssub.s32 %s10, 1
      // Predicated region
      $region13: #{fire_block.1} parent=11 // pred_check
        %p140 = pneg %p57
      $region14: #{fire_block.1} parent=11 // pred_check_branch
        %142 = sbr.rel (%p140) target = $region16
      $region15: #{fire_block.1} parent=11 // pred_region
        _
      $region16: #{fire_block.1} parent=11 // pred_fallthru
        _
      // Predicated region
      $region17: #{fire_block.1} parent=11 // pred_check
        %p143 = pneg %p78
      $region18: #{fire_block.1} parent=11 // pred_check_branch
        %145 = sbr.rel (%p143) target = $region20
      $region19: #{fire_block.1} parent=11 // pred_region
        _
      $region20: #{fire_block.1} parent=11 // pred_fallthru
        _
      // Predicated region
      $region21: #{fire_block.1} parent=11 // pred_check
        %p146 = pneg %p99
      $region22: #{fire_block.1} parent=11 // pred_check_branch
        %148 = sbr.rel (%p146) target = $region24
      $region23: #{fire_block.1} parent=11 // pred_region
        _
      $region24: #{fire_block.1} parent=11 // pred_fallthru
        _
    $region12: #{fire_block.1} parent=5 // pred_fallthru
      _
    %p149 = scmp.lt.s32.totalorder %s10, 2
    // Predicated region
    $region25: #{fire_block.1} parent=5 // pred_check
      %p150 = pneg %p149
    $region26: #{fire_block.1} parent=5 // pred_check_branch
      %152 = sbr.rel (%p150) target = $region28
    $region27: #{fire_block.1} parent=5 // pred_region
      // Predicated region
      $region29: #{fire_block.1} parent=27 // pred_check
        %p153 = pneg %p30
      $region30: #{fire_block.1} parent=27 // pred_check_branch
        %155 = sbr.rel (%p153) target = $region32
      $region31: #{fire_block.1} parent=27 // pred_region
        %p156 = scmp.lt.s32.totalorder %s10, 1
        %s157 = scalar_select %p156, %s10, 1
        %s158 = smul.addr %s157, 32
        %s159 = smul.addr %s158, 8
        %s160 = scalar_lea.vmem %s0, %s159
      $region32: #{fire_block.1} parent=27 // pred_fallthru
        _
    $region28: #{fire_block.1} parent=5 // pred_fallthru
      _
    %p161 = scmp.le.s32.totalorder 1, %s10
    %p162 = scmp.lt.s32.totalorder %s10, 3
    %p163 = pnand %p161, %p162
    %p164 = pneg %p163
    // Predicated region
    $region33: #{fire_block.1} parent=5 // pred_check
      _
    $region34: #{fire_block.1} parent=5 // pred_check_branch
      %166 = sbr.rel (%p163) target = $region36
    $region35: #{fire_block.1} parent=5 // pred_region
      %s167 = ssub.s32 %s10, 1
      %p168 = scmp.lt.s32.totalorder %s15, 1
      %s169 = scalar_select %p168, %s15, 1
      %s170 = smul.addr %s169, 32
      %s171 = smul.addr %s170, 8
      %s172 = scalar_lea.vmem %s0, %s171
      %p173 = pneg %p36
      %p174 = pneg %p33
      %p175 = pneg %p57
      %p176 = pneg %p54
      %p177 = pneg %p78
      %p178 = pneg %p75
      %p179 = pneg %p99
      %p180 = pneg %p96
      %p181 = pneg %p125
      %p182 = pneg %p122
      %p183 = scmp.lt.s32.totalorder %s15, 1
      %s184 = scalar_select %p183, %s15, 1
      %s185 = smul.addr %s184, 32
      %s186 = smul.addr %s185, 8
      %s187 = scalar_lea.vmem %s4, %s186
      %p188 = scmp.lt.s32.totalorder %s15, 1
      %s189 = scalar_select %p188, %s15, 1
      %s190 = smul.addr %s189, 32
      %s191 = smul.addr %s190, 8
      %s192 = scalar_lea.vmem %s0, %s191
      %p193 = scmp.lt.s32.totalorder %s15, 1
      %s194 = scalar_select %p193, %s15, 1
      %s195 = smul.addr %s194, 32
      %s196 = smul.addr %s195, 8
      %s197 = scalar_lea.vmem %s4, %s196
      %v198 = vld [vmem:[%s192] sm:$0xff]
      %v199 = vld [vmem:[%s192 + $0x8] sm:$0xff]
      %v200 = vld [vmem:[%s192 + $0x10] sm:$0xff]
      %v201 = vld [vmem:[%s192 + $0x18] sm:$0xff]
      %v202 = vld [vmem:[%s192 + $0x20] sm:$0xff]
      %v203 = vld [vmem:[%s192 + $0x28] sm:$0xff]
      %v204 = vld [vmem:[%s192 + $0x30] sm:$0xff]
      %v205 = vld [vmem:[%s192 + $0x38] sm:$0xff]
      %v206 = vld [vmem:[%s192 + $0x40] sm:$0xff]
      %v207 = vld [vmem:[%s192 + $0x48] sm:$0xff]
      %v208 = vld [vmem:[%s192 + $0x50] sm:$0xff]
      %v209 = vld [vmem:[%s192 + $0x58] sm:$0xff]
      %v210 = vld [vmem:[%s192 + $0x60] sm:$0xff]
      %v211 = vld [vmem:[%s192 + $0x68] sm:$0xff]
      %v212 = vld [vmem:[%s192 + $0x70] sm:$0xff]
      %v213 = vld [vmem:[%s192 + $0x78] sm:$0xff]
      %v214 = vld [vmem:[%s192 + $0x80] sm:$0xff]
      %v215 = vld [vmem:[%s192 + $0x88] sm:$0xff]
      %v216 = vld [vmem:[%s192 + $0x90] sm:$0xff]
      %v217 = vld [vmem:[%s192 + $0x98] sm:$0xff]
      %v218 = vld [vmem:[%s192 + $0xa0] sm:$0xff]
      %v219 = vld [vmem:[%s192 + $0xa8] sm:$0xff]
      %v220 = vld [vmem:[%s192 + $0xb0] sm:$0xff]
      %v221 = vld [vmem:[%s192 + $0xb8] sm:$0xff]
      %v222 = vld [vmem:[%s192 + $0xc0] sm:$0xff]
      %v223 = vld [vmem:[%s192 + $0xc8] sm:$0xff]
      %v224 = vld [vmem:[%s192 + $0xd0] sm:$0xff]
      %v225 = vld [vmem:[%s192 + $0xd8] sm:$0xff]
      %v226 = vld [vmem:[%s192 + $0xe0] sm:$0xff]
      %v227 = vld [vmem:[%s192 + $0xe8] sm:$0xff]
      %v228 = vld [vmem:[%s192 + $0xf0] sm:$0xff]
      %v229 = vld [vmem:[%s192 + $0xf8] sm:$0xff]
      %v230 = vld [vmem:[%s1] sm:$0xf]
      %vm231 = vcmask 31744
      %v233 = vsel %vm231, %v198, 0
      %v236 = vsel %vm231, %v199, 0
      %v239 = vsel %vm231, %v200, 0
      %v242 = vsel %vm231, %v201, 0
      %v245 = vsel %vm231, %v202, 0
      %v248 = vsel %vm231, %v203, 0
      %v251 = vsel %vm231, %v204, 0
      %v254 = vsel %vm231, %v205, 0
      %v257 = vsel %vm231, %v206, 0
      %v260 = vsel %vm231, %v207, 0
      %v263 = vsel %vm231, %v208, 0
      %v266 = vsel %vm231, %v209, 0
      %v269 = vsel %vm231, %v210, 0
      %v272 = vsel %vm231, %v211, 0
      %v275 = vsel %vm231, %v212, 0
      %v278 = vsel %vm231, %v213, 0
      %v281 = vsel %vm231, %v214, 0
      %v284 = vsel %vm231, %v215, 0
      %v287 = vsel %vm231, %v216, 0
      %v290 = vsel %vm231, %v217, 0
      %v293 = vsel %vm231, %v218, 0
      %v296 = vsel %vm231, %v219, 0
      %v299 = vsel %vm231, %v220, 0
      %v302 = vsel %vm231, %v221, 0
      %v305 = vsel %vm231, %v222, 0
      %v308 = vsel %vm231, %v223, 0
      %v311 = vsel %vm231, %v224, 0
      %v314 = vsel %vm231, %v225, 0
      %v317 = vsel %vm231, %v226, 0
      %v320 = vsel %vm231, %v227, 0
      %v323 = vsel %vm231, %v228, 0
      %v326 = vsel %vm231, %v229, 0
      %vm328 = vcmask 1043456
      %v330 = vsel %vm328, %v230, 0
      %332 = vmatprep.subr.mxu0 0.0
      %333 = vmatpush1.msra.mxu0 %v330
      %334 = vmatprep.subr.mxu0 0.0
      %335 = vmatpush1.msra.mxu0 0.0
      %336 = vmatprep.subr.mxu0 0.0
      %337 = vmatpush1.msra.mxu0 0.0
      %338 = vmatprep.subr.mxu0 0.0
      %339 = vmatpush1.msra.mxu0 0.0
      %340 = vmatprep.subr.mxu0 0.0
      %341 = vmatpush1.msra.mxu0 0.0
      %342 = vmatprep.subr.mxu0 0.0
      %343 = vmatpush1.msra.mxu0 0.0
      %344 = vmatprep.subr.mxu0 0.0
      %345 = vmatpush1.msra.mxu0 0.0
      %346 = vmatprep.subr.mxu0 0.0
      %347 = vmatpush1.msra.mxu0 0.0
      %348 = vmatprep.subr.mxu0 0.0
      %349 = vmatpush1.msra.mxu0 0.0
      %350 = vmatprep.subr.mxu0 0.0
      %351 = vmatpush1.msra.mxu0 0.0
      %352 = vmatprep.subr.mxu0 0.0
      %353 = vmatpush1.msra.mxu0 0.0
      %354 = vmatprep.subr.mxu0 0.0
      %355 = vmatpush1.msra.mxu0 0.0
      %356 = vmatprep.subr.mxu0 0.0
      %357 = vmatpush1.msra.mxu0 0.0
      %358 = vmatprep.subr.mxu0 0.0
      %359 = vmatpush1.msra.mxu0 0.0
      %360 = vmatprep.subr.mxu0 0.0
      %361 = vmatpush1.msra.mxu0 0.0
      %362 = vmatprep.subr.mxu0 0.0
      %363 = vmatpush1.msra.mxu0 0.0
      %364 = vmatprep.subr.mxu0 0.0
      %365 = vmatpush1.msra.mxu0 0.0
      %366 = vmatprep.subr.mxu0 0.0
      %367 = vmatpush1.msra.mxu0 0.0
      %368 = vmatprep.subr.mxu0 0.0
      %369 = vmatpush1.msra.mxu0 0.0
      %370 = vmatprep.subr.mxu0 0.0
      %371 = vmatpush1.msra.mxu0 0.0
      %372 = vmatprep.subr.mxu0 0.0
      %373 = vmatpush1.msra.mxu0 0.0
      %374 = vmatprep.subr.mxu0 0.0
      %375 = vmatpush1.msra.mxu0 0.0
      %376 = vmatprep.subr.mxu0 0.0
      %377 = vmatpush1.msra.mxu0 0.0
      %378 = vmatprep.subr.mxu0 0.0
      %379 = vmatpush1.msra.mxu0 0.0
      %380 = vmatprep.subr.mxu0 0.0
      %381 = vmatpush1.msra.mxu0 0.0
      %382 = vmatprep.subr.mxu0 0.0
      %383 = vmatpush1.msra.mxu0 0.0
      %384 = vmatprep.subr.mxu0 0.0
      %385 = vmatpush1.msra.mxu0 0.0
      %386 = vmatprep.subr.mxu0 0.0
      %387 = vmatpush1.msra.mxu0 0.0
      %388 = vmatprep.subr.mxu0 0.0
      %389 = vmatpush1.msra.mxu0 0.0
      %390 = vmatprep.subr.mxu0 0.0
      %391 = vmatpush1.msra.mxu0 0.0
      %392 = vmatprep.subr.mxu0 0.0
      %393 = vmatpush1.msra.mxu0 0.0
      %394 = vmatprep.subr.mxu0 0.0
      %395 = vmatpush1.msra.mxu0 0.0
      %396 = vmatprep.mubr.f32.mxu0 0.0
      %397 = vmatmul.mubr.f32.gmra.mrb[0].mxu0 %v233
      %v398 = vpop.f32.mrb[0].mxu0
      %v399 = vadd.f32 0.0, %v398
      %v400 = vpop.f32.mrb[0].mxu0
      %401 = vmatprep.mubr.f32.mxu0 0.0
      %402 = vmatmul.mubr.f32.gmra.mrb[0].mxu0 %v236
      %v403 = vpop.f32.mrb[0].mxu0
      %v404 = vadd.f32 0.0, %v403
      %v405 = vpop.f32.mrb[0].mxu0
      %406 = vmatprep.mubr.f32.mxu0 0.0
      %407 = vmatmul.mubr.f32.gmra.mrb[0].mxu0 %v239
      %v408 = vpop.f32.mrb[0].mxu0
      %v409 = vadd.f32 0.0, %v408
      %v410 = vpop.f32.mrb[0].mxu0
      %411 = vmatprep.mubr.f32.mxu0 0.0
      %412 = vmatmul.mubr.f32.gmra.mrb[0].mxu0 %v242
      %v413 = vpop.f32.mrb[0].mxu0
      %v414 = vadd.f32 0.0, %v413
      %v415 = vpop.f32.mrb[0].mxu0
      %416 = vmatprep.mubr.f32.mxu0 0.0
      %417 = vmatmul.mubr.f32.gmra.mrb[0].mxu0 %v245
      %v418 = vpop.f32.mrb[0].mxu0
      %v419 = vadd.f32 0.0, %v418
      %v420 = vpop.f32.mrb[0].mxu0
      %421 = vmatprep.mubr.f32.mxu0 0.0
      %422 = vmatmul.mubr.f32.gmra.mrb[0].mxu0 %v248
      %v423 = vpop.f32.mrb[0].mxu0
      %v424 = vadd.f32 0.0, %v423
      %v425 = vpop.f32.mrb[0].mxu0
      %426 = vmatprep.mubr.f32.mxu0 0.0
      %427 = vmatmul.mubr.f32.gmra.mrb[0].mxu0 %v251
      %v428 = vpop.f32.mrb[0].mxu0
      %v429 = vadd.f32 0.0, %v428
      %v430 = vpop.f32.mrb[0].mxu0
      %431 = vmatprep.mubr.f32.mxu0 0.0
      %432 = vmatmul.mubr.f32.gmra.mrb[0].mxu0 %v254
      %v433 = vpop.f32.mrb[0].mxu0
      %v434 = vadd.f32 0.0, %v433
      %v435 = vpop.f32.mrb[0].mxu0
      %436 = vmatprep.mubr.f32.mxu0 0.0
      %437 = vmatmul.mubr.f32.gmra.mrb[0].mxu0 %v257
      %v438 = vpop.f32.mrb[0].mxu0
      %v439 = vadd.f32 0.0, %v438
      %v440 = vpop.f32.mrb[0].mxu0
      %441 = vmatprep.mubr.f32.mxu0 0.0
      %442 = vmatmul.mubr.f32.gmra.mrb[0].mxu0 %v260
      %v443 = vpop.f32.mrb[0].mxu0
      %v444 = vadd.f32 0.0, %v443
      %v445 = vpop.f32.mrb[0].mxu0
      %446 = vmatprep.mubr.f32.mxu0 0.0
      %447 = vmatmul.mubr.f32.gmra.mrb[0].mxu0 %v263
      %v448 = vpop.f32.mrb[0].mxu0
      %v449 = vadd.f32 0.0, %v448
      %v450 = vpop.f32.mrb[0].mxu0
      %451 = vmatprep.mubr.f32.mxu0 0.0
      %452 = vmatmul.mubr.f32.gmra.mrb[0].mxu0 %v266
      %v453 = vpop.f32.mrb[0].mxu0
      %v454 = vadd.f32 0.0, %v453
      %v455 = vpop.f32.mrb[0].mxu0
      %456 = vmatprep.mubr.f32.mxu0 0.0
      %457 = vmatmul.mubr.f32.gmra.mrb[0].mxu0 %v269
      %v458 = vpop.f32.mrb[0].mxu0
      %v459 = vadd.f32 0.0, %v458
      %v460 = vpop.f32.mrb[0].mxu0
      %461 = vmatprep.mubr.f32.mxu0 0.0
      %462 = vmatmul.mubr.f32.gmra.mrb[0].mxu0 %v272
      %v463 = vpop.f32.mrb[0].mxu0
      %v464 = vadd.f32 0.0, %v463
      %v465 = vpop.f32.mrb[0].mxu0
      %466 = vmatprep.mubr.f32.mxu0 0.0
      %467 = vmatmul.mubr.f32.gmra.mrb[0].mxu0 %v275
      %v468 = vpop.f32.mrb[0].mxu0
      %v469 = vadd.f32 0.0, %v468
      %v470 = vpop.f32.mrb[0].mxu0
      %471 = vmatprep.mubr.f32.mxu0 0.0
      %472 = vmatmul.mubr.f32.gmra.mrb[0].mxu0 %v278
      %v473 = vpop.f32.mrb[0].mxu0
      %v474 = vadd.f32 0.0, %v473
      %v475 = vpop.f32.mrb[0].mxu0
      %476 = vmatprep.mubr.f32.mxu0 0.0
      %477 = vmatmul.mubr.f32.gmra.mrb[0].mxu0 %v281
      %v478 = vpop.f32.mrb[0].mxu0
      %v479 = vadd.f32 0.0, %v478
      %v480 = vpop.f32.mrb[0].mxu0
      %481 = vmatprep.mubr.f32.mxu0 0.0
      %482 = vmatmul.mubr.f32.gmra.mrb[0].mxu0 %v284
      %v483 = vpop.f32.mrb[0].mxu0
      %v484 = vadd.f32 0.0, %v483
      %v485 = vpop.f32.mrb[0].mxu0
      %486 = vmatprep.mubr.f32.mxu0 0.0
      %487 = vmatmul.mubr.f32.gmra.mrb[0].mxu0 %v287
      %v488 = vpop.f32.mrb[0].mxu0
      %v489 = vadd.f32 0.0, %v488
      %v490 = vpop.f32.mrb[0].mxu0
      %491 = vmatprep.mubr.f32.mxu0 0.0
      %492 = vmatmul.mubr.f32.gmra.mrb[0].mxu0 %v290
      %v493 = vpop.f32.mrb[0].mxu0
      %v494 = vadd.f32 0.0, %v493
      %v495 = vpop.f32.mrb[0].mxu0
      %496 = vmatprep.mubr.f32.mxu0 0.0
      %497 = vmatmul.mubr.f32.gmra.mrb[0].mxu0 %v293
      %v498 = vpop.f32.mrb[0].mxu0
      %v499 = vadd.f32 0.0, %v498
      %v500 = vpop.f32.mrb[0].mxu0
      %501 = vmatprep.mubr.f32.mxu0 0.0
      %502 = vmatmul.mubr.f32.gmra.mrb[0].mxu0 %v296
      %v503 = vpop.f32.mrb[0].mxu0
      %v504 = vadd.f32 0.0, %v503
      %v505 = vpop.f32.mrb[0].mxu0
      %506 = vmatprep.mubr.f32.mxu0 0.0
      %507 = vmatmul.mubr.f32.gmra.mrb[0].mxu0 %v299
      %v508 = vpop.f32.mrb[0].mxu0
      %v509 = vadd.f32 0.0, %v508
      %v510 = vpop.f32.mrb[0].mxu0
      %511 = vmatprep.mubr.f32.mxu0 0.0
      %512 = vmatmul.mubr.f32.gmra.mrb[0].mxu0 %v302
      %v513 = vpop.f32.mrb[0].mxu0
      %v514 = vadd.f32 0.0, %v513
      %v515 = vpop.f32.mrb[0].mxu0
      %516 = vmatprep.mubr.f32.mxu0 0.0
      %517 = vmatmul.mubr.f32.gmra.mrb[0].mxu0 %v305
      %v518 = vpop.f32.mrb[0].mxu0
      %v519 = vadd.f32 0.0, %v518
      %v520 = vpop.f32.mrb[0].mxu0
      %521 = vmatprep.mubr.f32.mxu0 0.0
      %522 = vmatmul.mubr.f32.gmra.mrb[0].mxu0 %v308
      %v523 = vpop.f32.mrb[0].mxu0
      %v524 = vadd.f32 0.0, %v523
      %v525 = vpop.f32.mrb[0].mxu0
      %526 = vmatprep.mubr.f32.mxu0 0.0
      %527 = vmatmul.mubr.f32.gmra.mrb[0].mxu0 %v311
      %v528 = vpop.f32.mrb[0].mxu0
      %v529 = vadd.f32 0.0, %v528
      %v530 = vpop.f32.mrb[0].mxu0
      %531 = vmatprep.mubr.f32.mxu0 0.0
      %532 = vmatmul.mubr.f32.gmra.mrb[0].mxu0 %v314
      %v533 = vpop.f32.mrb[0].mxu0
      %v534 = vadd.f32 0.0, %v533
      %v535 = vpop.f32.mrb[0].mxu0
      %536 = vmatprep.mubr.f32.mxu0 0.0
      %537 = vmatmul.mubr.f32.gmra.mrb[0].mxu0 %v317
      %v538 = vpop.f32.mrb[0].mxu0
      %v539 = vadd.f32 0.0, %v538
      %v540 = vpop.f32.mrb[0].mxu0
      %541 = vmatprep.mubr.f32.mxu0 0.0
      %542 = vmatmul.mubr.f32.gmra.mrb[0].mxu0 %v320
      %v543 = vpop.f32.mrb[0].mxu0
      %v544 = vadd.f32 0.0, %v543
      %v545 = vpop.f32.mrb[0].mxu0
      %546 = vmatprep.mubr.f32.mxu0 0.0
      %547 = vmatmul.mubr.f32.gmra.mrb[0].mxu0 %v323
      %v548 = vpop.f32.mrb[0].mxu0
      %v549 = vadd.f32 0.0, %v548
      %v550 = vpop.f32.mrb[0].mxu0
      %551 = vmatprep.mubr.f32.mxu0 0.0
      %552 = vmatmul.mubr.f32.gmra.mrb[0].mxu0 %v326
      %v553 = vpop.f32.mrb[0].mxu0
      %v554 = vadd.f32 0.0, %v553
      %v555 = vpop.f32.mrb[0].mxu0
      %556 = vdwg.mxu0
      %v557 = vmax.f32 %v399, 0.0
      %v558 = vmax.f32 %v404, 0.0
      %v559 = vmax.f32 %v409, 0.0
      %v560 = vmax.f32 %v414, 0.0
      %v561 = vmax.f32 %v419, 0.0
      %v562 = vmax.f32 %v424, 0.0
      %v563 = vmax.f32 %v429, 0.0
      %v564 = vmax.f32 %v434, 0.0
      %v565 = vmax.f32 %v439, 0.0
      %v566 = vmax.f32 %v444, 0.0
      %v567 = vmax.f32 %v449, 0.0
      %v568 = vmax.f32 %v454, 0.0
      %v569 = vmax.f32 %v459, 0.0
      %v570 = vmax.f32 %v464, 0.0
      %v571 = vmax.f32 %v469, 0.0
      %v572 = vmax.f32 %v474, 0.0
      %v573 = vmax.f32 %v479, 0.0
      %v574 = vmax.f32 %v484, 0.0
      %v575 = vmax.f32 %v489, 0.0
      %v576 = vmax.f32 %v494, 0.0
      %v577 = vmax.f32 %v499, 0.0
      %v578 = vmax.f32 %v504, 0.0
      %v579 = vmax.f32 %v509, 0.0
      %v580 = vmax.f32 %v514, 0.0
      %v581 = vmax.f32 %v519, 0.0
      %v582 = vmax.f32 %v524, 0.0
      %v583 = vmax.f32 %v529, 0.0
      %v584 = vmax.f32 %v534, 0.0
      %v585 = vmax.f32 %v539, 0.0
      %v586 = vmax.f32 %v544, 0.0
      %v587 = vmax.f32 %v549, 0.0
      %v588 = vmax.f32 %v554, 0.0
      %vm620 = vcmask 1040384
      %v621 = vrot.slane 0.0, 7
      %v622 = vsel %vm620, %v621, %v621
      %v623 = vrot.slane %v557, 7
      %v624 = vrot.slane %v558, 7
      %v625 = vsel %vm620, %v623, %v624
      %v626 = vrot.slane %v559, 7
      %v627 = vrot.slane %v560, 7
      %v628 = vsel %vm620, %v626, %v627
      %v629 = vrot.slane %v561, 7
      %v630 = vrot.slane %v562, 7
      %v631 = vsel %vm620, %v629, %v630
      %v632 = vrot.slane %v563, 7
      %v633 = vrot.slane %v564, 7
      %v634 = vsel %vm620, %v632, %v633
      %v635 = vrot.slane %v565, 7
      %v636 = vrot.slane %v566, 7
      %v637 = vsel %vm620, %v635, %v636
      %v638 = vrot.slane %v567, 7
      %v639 = vrot.slane %v568, 7
      %v640 = vsel %vm620, %v638, %v639
      %v641 = vrot.slane %v569, 7
      %v642 = vrot.slane %v570, 7
      %v643 = vsel %vm620, %v641, %v642
      %v644 = vrot.slane %v571, 7
      %v645 = vrot.slane %v572, 7
      %v646 = vsel %vm620, %v644, %v645
      %v647 = vrot.slane %v573, 7
      %v648 = vrot.slane %v574, 7
      %v649 = vsel %vm620, %v647, %v648
      %v650 = vrot.slane %v575, 7
      %v651 = vrot.slane %v576, 7
      %v652 = vsel %vm620, %v650, %v651
      %v653 = vrot.slane %v577, 7
      %v654 = vrot.slane %v578, 7
      %v655 = vsel %vm620, %v653, %v654
      %v656 = vrot.slane %v579, 7
      %v657 = vrot.slane %v580, 7
      %v658 = vsel %vm620, %v656, %v657
      %v659 = vrot.slane %v581, 7
      %v660 = vrot.slane %v582, 7
      %v661 = vsel %vm620, %v659, %v660
      %v662 = vrot.slane %v583, 7
      %v663 = vrot.slane %v584, 7
      %v664 = vsel %vm620, %v662, %v663
      %v665 = vrot.slane %v585, 7
      %v666 = vrot.slane %v586, 7
      %v667 = vsel %vm620, %v665, %v666
      %v700 = vsel %vm620, 0.0, %v621
      %v701 = vsel %vm620, 0.0, %v623
      %v702 = vsel %vm620, 0.0, %v626
      %v703 = vsel %vm620, 0.0, %v629
      %v704 = vsel %vm620, 0.0, %v632
      %v705 = vsel %vm620, 0.0, %v635
      %v706 = vsel %vm620, 0.0, %v638
      %v707 = vsel %vm620, 0.0, %v641
      %v708 = vsel %vm620, 0.0, %v644
      %v709 = vsel %vm620, 0.0, %v647
      %v710 = vsel %vm620, 0.0, %v650
      %v711 = vsel %vm620, 0.0, %v653
      %v712 = vsel %vm620, 0.0, %v656
      %v713 = vsel %vm620, 0.0, %v659
      %v714 = vsel %vm620, 0.0, %v662
      %v715 = vsel %vm620, 0.0, %v665
      %vm716 = vcmask 1046528
      %v717 = vrot.slane 0.0, 1
      %v718 = vsel %vm716, %v717, %v717
      %v719 = vrot.slane %v557, 1
      %v720 = vrot.slane %v558, 1
      %v721 = vsel %vm716, %v719, %v720
      %v722 = vrot.slane %v559, 1
      %v723 = vrot.slane %v560, 1
      %v724 = vsel %vm716, %v722, %v723
      %v725 = vrot.slane %v561, 1
      %v726 = vrot.slane %v562, 1
      %v727 = vsel %vm716, %v725, %v726
      %v728 = vrot.slane %v563, 1
      %v729 = vrot.slane %v564, 1
      %v730 = vsel %vm716, %v728, %v729
      %v731 = vrot.slane %v565, 1
      %v732 = vrot.slane %v566, 1
      %v733 = vsel %vm716, %v731, %v732
      %v734 = vrot.slane %v567, 1
      %v735 = vrot.slane %v568, 1
      %v736 = vsel %vm716, %v734, %v735
      %v737 = vrot.slane %v569, 1
      %v738 = vrot.slane %v570, 1
      %v739 = vsel %vm716, %v737, %v738
      %v740 = vrot.slane %v571, 1
      %v741 = vrot.slane %v572, 1
      %v742 = vsel %vm716, %v740, %v741
      %v743 = vrot.slane %v573, 1
      %v744 = vrot.slane %v574, 1
      %v745 = vsel %vm716, %v743, %v744
      %v746 = vrot.slane %v575, 1
      %v747 = vrot.slane %v576, 1
      %v748 = vsel %vm716, %v746, %v747
      %v749 = vrot.slane %v577, 1
      %v750 = vrot.slane %v578, 1
      %v751 = vsel %vm716, %v749, %v750
      %v752 = vrot.slane %v579, 1
      %v753 = vrot.slane %v580, 1
      %v754 = vsel %vm716, %v752, %v753
      %v755 = vrot.slane %v581, 1
      %v756 = vrot.slane %v582, 1
      %v757 = vsel %vm716, %v755, %v756
      %v758 = vrot.slane %v583, 1
      %v759 = vrot.slane %v584, 1
      %v760 = vsel %vm716, %v758, %v759
      %v761 = vrot.slane %v585, 1
      %v762 = vrot.slane %v586, 1
      %v763 = vsel %vm716, %v761, %v762
      %v780 = vsel %vm716, %v717, 0.0
      %v781 = vsel %vm716, %v720, 0.0
      %v782 = vsel %vm716, %v723, 0.0
      %v783 = vsel %vm716, %v726, 0.0
      %v784 = vsel %vm716, %v729, 0.0
      %v785 = vsel %vm716, %v732, 0.0
      %v786 = vsel %vm716, %v735, 0.0
      %v787 = vsel %vm716, %v738, 0.0
      %v788 = vsel %vm716, %v741, 0.0
      %v789 = vsel %vm716, %v744, 0.0
      %v790 = vsel %vm716, %v747, 0.0
      %v791 = vsel %vm716, %v750, 0.0
      %v792 = vsel %vm716, %v753, 0.0
      %v793 = vsel %vm716, %v756, 0.0
      %v794 = vsel %vm716, %v759, 0.0
      %v795 = vsel %vm716, %v762, 0.0
      %v798 = vrot.slane %v587, 7
      %v799 = vrot.slane %v588, 7
      %v800 = vsel %vm620, %v798, %v799
      %v802 = vsel %vm620, 0.0, %v798
      %v803 = vrot.slane %v587, 1
      %v804 = vrot.slane %v588, 1
      %v805 = vsel %vm716, %v803, %v804
      %v807 = vsel %vm716, %v804, 0.0
      %808 = vrot.lane.b32.xlu0 0.0, 2
      %v809 = vpop.permute.xlu0 %808
      %810 = vrot.lane.b32.xlu0 %v557, 2
      %v811 = vpop.permute.xlu0 %810
      %812 = vrot.lane.b32.xlu0 %v558, 2
      %v813 = vpop.permute.xlu0 %812
      %814 = vrot.lane.b32.xlu0 %v559, 2
      %v815 = vpop.permute.xlu0 %814
      %816 = vrot.lane.b32.xlu0 %v560, 2
      %v817 = vpop.permute.xlu0 %816
      %818 = vrot.lane.b32.xlu0 %v561, 2
      %v819 = vpop.permute.xlu0 %818
      %820 = vrot.lane.b32.xlu0 %v562, 2
      %v821 = vpop.permute.xlu0 %820
      %822 = vrot.lane.b32.xlu0 %v563, 2
      %v823 = vpop.permute.xlu0 %822
      %824 = vrot.lane.b32.xlu0 %v564, 2
      %v825 = vpop.permute.xlu0 %824
      %826 = vrot.lane.b32.xlu0 %v565, 2
      %v827 = vpop.permute.xlu0 %826
      %828 = vrot.lane.b32.xlu0 %v566, 2
      %v829 = vpop.permute.xlu0 %828
      %830 = vrot.lane.b32.xlu0 %v567, 2
      %v831 = vpop.permute.xlu0 %830
      %832 = vrot.lane.b32.xlu0 %v568, 2
      %v833 = vpop.permute.xlu0 %832
      %834 = vrot.lane.b32.xlu0 %v569, 2
      %v835 = vpop.permute.xlu0 %834
      %836 = vrot.lane.b32.xlu0 %v570, 2
      %v837 = vpop.permute.xlu0 %836
      %838 = vrot.lane.b32.xlu0 %v571, 2
      %v839 = vpop.permute.xlu0 %838
      %840 = vrot.lane.b32.xlu0 %v572, 2
      %v841 = vpop.permute.xlu0 %840
      %842 = vrot.lane.b32.xlu0 %v573, 2
      %v843 = vpop.permute.xlu0 %842
      %844 = vrot.lane.b32.xlu0 %v574, 2
      %v845 = vpop.permute.xlu0 %844
      %846 = vrot.lane.b32.xlu0 %v575, 2
      %v847 = vpop.permute.xlu0 %846
      %848 = vrot.lane.b32.xlu0 %v576, 2
      %v849 = vpop.permute.xlu0 %848
      %850 = vrot.lane.b32.xlu0 %v577, 2
      %v851 = vpop.permute.xlu0 %850
      %852 = vrot.lane.b32.xlu0 %v578, 2
      %v853 = vpop.permute.xlu0 %852
      %854 = vrot.lane.b32.xlu0 %v579, 2
      %v855 = vpop.permute.xlu0 %854
      %856 = vrot.lane.b32.xlu0 %v580, 2
      %v857 = vpop.permute.xlu0 %856
      %858 = vrot.lane.b32.xlu0 %v581, 2
      %v859 = vpop.permute.xlu0 %858
      %860 = vrot.lane.b32.xlu0 %v582, 2
      %v861 = vpop.permute.xlu0 %860
      %862 = vrot.lane.b32.xlu0 %v583, 2
      %v863 = vpop.permute.xlu0 %862
      %864 = vrot.lane.b32.xlu0 %v584, 2
      %v865 = vpop.permute.xlu0 %864
      %866 = vrot.lane.b32.xlu0 %v585, 2
      %v867 = vpop.permute.xlu0 %866
      %868 = vrot.lane.b32.xlu0 %v586, 2
      %v869 = vpop.permute.xlu0 %868
      %917 = vrot.lane.b32.xlu0 %v718, 4
      %v918 = vpop.permute.xlu0 %917
      %919 = vrot.lane.b32.xlu0 %v780, 4
      %v920 = vpop.permute.xlu0 %919
      %921 = vrot.lane.b32.xlu0 %v721, 4
      %v922 = vpop.permute.xlu0 %921
      %923 = vrot.lane.b32.xlu0 %v781, 4
      %v924 = vpop.permute.xlu0 %923
      %925 = vrot.lane.b32.xlu0 %v724, 4
      %v926 = vpop.permute.xlu0 %925
      %927 = vrot.lane.b32.xlu0 %v782, 4
      %v928 = vpop.permute.xlu0 %927
      %929 = vrot.lane.b32.xlu0 %v727, 4
      %v930 = vpop.permute.xlu0 %929
      %931 = vrot.lane.b32.xlu0 %v783, 4
      %v932 = vpop.permute.xlu0 %931
      %933 = vrot.lane.b32.xlu0 %v730, 4
      %v934 = vpop.permute.xlu0 %933
      %935 = vrot.lane.b32.xlu0 %v784, 4
      %v936 = vpop.permute.xlu0 %935
      %937 = vrot.lane.b32.xlu0 %v733, 4
      %v938 = vpop.permute.xlu0 %937
      %939 = vrot.lane.b32.xlu0 %v785, 4
      %v940 = vpop.permute.xlu0 %939
      %941 = vrot.lane.b32.xlu0 %v736, 4
      %v942 = vpop.permute.xlu0 %941
      %943 = vrot.lane.b32.xlu0 %v786, 4
      %v944 = vpop.permute.xlu0 %943
      %945 = vrot.lane.b32.xlu0 %v739, 4
      %v946 = vpop.permute.xlu0 %945
      %947 = vrot.lane.b32.xlu0 %v787, 4
      %v948 = vpop.permute.xlu0 %947
      %949 = vrot.lane.b32.xlu0 %v742, 4
      %v950 = vpop.permute.xlu0 %949
      %951 = vrot.lane.b32.xlu0 %v788, 4
      %v952 = vpop.permute.xlu0 %951
      %953 = vrot.lane.b32.xlu0 %v745, 4
      %v954 = vpop.permute.xlu0 %953
      %955 = vrot.lane.b32.xlu0 %v789, 4
      %v956 = vpop.permute.xlu0 %955
      %957 = vrot.lane.b32.xlu0 %v748, 4
      %v958 = vpop.permute.xlu0 %957
      %959 = vrot.lane.b32.xlu0 %v790, 4
      %v960 = vpop.permute.xlu0 %959
      %961 = vrot.lane.b32.xlu0 %v751, 4
      %v962 = vpop.permute.xlu0 %961
      %963 = vrot.lane.b32.xlu0 %v791, 4
      %v964 = vpop.permute.xlu0 %963
      %965 = vrot.lane.b32.xlu0 %v754, 4
      %v966 = vpop.permute.xlu0 %965
      %967 = vrot.lane.b32.xlu0 %v792, 4
      %v968 = vpop.permute.xlu0 %967
      %969 = vrot.lane.b32.xlu0 %v757, 4
      %v970 = vpop.permute.xlu0 %969
      %971 = vrot.lane.b32.xlu0 %v793, 4
      %v972 = vpop.permute.xlu0 %971
      %973 = vrot.lane.b32.xlu0 %v760, 4
      %v974 = vpop.permute.xlu0 %973
      %975 = vrot.lane.b32.xlu0 %v794, 4
      %v976 = vpop.permute.xlu0 %975
      %977 = vrot.lane.b32.xlu0 %v763, 4
      %v978 = vpop.permute.xlu0 %977
      %979 = vrot.lane.b32.xlu0 %v795, 4
      %v980 = vpop.permute.xlu0 %979
      %1029 = vrot.lane.b32.xlu0 %v701, 6
      %v1030 = vpop.permute.xlu0 %1029
      %1031 = vrot.lane.b32.xlu0 %v625, 6
      %v1032 = vpop.permute.xlu0 %1031
      %1033 = vrot.lane.b32.xlu0 %v702, 6
      %v1034 = vpop.permute.xlu0 %1033
      %1035 = vrot.lane.b32.xlu0 %v628, 6
      %v1036 = vpop.permute.xlu0 %1035
      %1037 = vrot.lane.b32.xlu0 %v703, 6
      %v1038 = vpop.permute.xlu0 %1037
      %1039 = vrot.lane.b32.xlu0 %v631, 6
      %v1040 = vpop.permute.xlu0 %1039
      %1041 = vrot.lane.b32.xlu0 %v704, 6
      %v1042 = vpop.permute.xlu0 %1041
      %1043 = vrot.lane.b32.xlu0 %v634, 6
      %v1044 = vpop.permute.xlu0 %1043
      %1045 = vrot.lane.b32.xlu0 %v705, 6
      %v1046 = vpop.permute.xlu0 %1045
      %1047 = vrot.lane.b32.xlu0 %v637, 6
      %v1048 = vpop.permute.xlu0 %1047
      %1049 = vrot.lane.b32.xlu0 %v706, 6
      %v1050 = vpop.permute.xlu0 %1049
      %1051 = vrot.lane.b32.xlu0 %v640, 6
      %v1052 = vpop.permute.xlu0 %1051
      %1053 = vrot.lane.b32.xlu0 %v707, 6
      %v1054 = vpop.permute.xlu0 %1053
      %1055 = vrot.lane.b32.xlu0 %v643, 6
      %v1056 = vpop.permute.xlu0 %1055
      %1057 = vrot.lane.b32.xlu0 %v708, 6
      %v1058 = vpop.permute.xlu0 %1057
      %1059 = vrot.lane.b32.xlu0 %v646, 6
      %v1060 = vpop.permute.xlu0 %1059
      %1061 = vrot.lane.b32.xlu0 %v709, 6
      %v1062 = vpop.permute.xlu0 %1061
      %1063 = vrot.lane.b32.xlu0 %v649, 6
      %v1064 = vpop.permute.xlu0 %1063
      %1065 = vrot.lane.b32.xlu0 %v710, 6
      %v1066 = vpop.permute.xlu0 %1065
      %1067 = vrot.lane.b32.xlu0 %v652, 6
      %v1068 = vpop.permute.xlu0 %1067
      %1069 = vrot.lane.b32.xlu0 %v711, 6
      %v1070 = vpop.permute.xlu0 %1069
      %1071 = vrot.lane.b32.xlu0 %v655, 6
      %v1072 = vpop.permute.xlu0 %1071
      %1073 = vrot.lane.b32.xlu0 %v712, 6
      %v1074 = vpop.permute.xlu0 %1073
      %1075 = vrot.lane.b32.xlu0 %v658, 6
      %v1076 = vpop.permute.xlu0 %1075
      %1077 = vrot.lane.b32.xlu0 %v713, 6
      %v1078 = vpop.permute.xlu0 %1077
      %1079 = vrot.lane.b32.xlu0 %v661, 6
      %v1080 = vpop.permute.xlu0 %1079
      %1081 = vrot.lane.b32.xlu0 %v714, 6
      %v1082 = vpop.permute.xlu0 %1081
      %1083 = vrot.lane.b32.xlu0 %v664, 6
      %v1084 = vpop.permute.xlu0 %1083
      %1085 = vrot.lane.b32.xlu0 %v715, 6
      %v1086 = vpop.permute.xlu0 %1085
      %1087 = vrot.lane.b32.xlu0 %v667, 6
      %v1088 = vpop.permute.xlu0 %1087
      %1089 = vrot.lane.b32.xlu0 %v802, 6
      %v1090 = vpop.permute.xlu0 %1089
      %1091 = vrot.lane.b32.xlu0 %v800, 6
      %v1092 = vpop.permute.xlu0 %1091
      %1125 = vrot.lane.b32.xlu0 %v557, 8
      %v1126 = vpop.permute.xlu0 %1125
      %1127 = vrot.lane.b32.xlu0 %v558, 8
      %v1128 = vpop.permute.xlu0 %1127
      %1129 = vrot.lane.b32.xlu0 %v559, 8
      %v1130 = vpop.permute.xlu0 %1129
      %1131 = vrot.lane.b32.xlu0 %v560, 8
      %v1132 = vpop.permute.xlu0 %1131
      %1133 = vrot.lane.b32.xlu0 %v561, 8
      %v1134 = vpop.permute.xlu0 %1133
      %1135 = vrot.lane.b32.xlu0 %v562, 8
      %v1136 = vpop.permute.xlu0 %1135
      %1137 = vrot.lane.b32.xlu0 %v563, 8
      %v1138 = vpop.permute.xlu0 %1137
      %1139 = vrot.lane.b32.xlu0 %v564, 8
      %v1140 = vpop.permute.xlu0 %1139
      %1141 = vrot.lane.b32.xlu0 %v565, 8
      %v1142 = vpop.permute.xlu0 %1141
      %1143 = vrot.lane.b32.xlu0 %v566, 8
      %v1144 = vpop.permute.xlu0 %1143
      %1145 = vrot.lane.b32.xlu0 %v567, 8
      %v1146 = vpop.permute.xlu0 %1145
      %1147 = vrot.lane.b32.xlu0 %v568, 8
      %v1148 = vpop.permute.xlu0 %1147
      %1149 = vrot.lane.b32.xlu0 %v569, 8
      %v1150 = vpop.permute.xlu0 %1149
      %1151 = vrot.lane.b32.xlu0 %v570, 8
      %v1152 = vpop.permute.xlu0 %1151
      %1153 = vrot.lane.b32.xlu0 %v571, 8
      %v1154 = vpop.permute.xlu0 %1153
      %1155 = vrot.lane.b32.xlu0 %v572, 8
      %v1156 = vpop.permute.xlu0 %1155
      %1157 = vrot.lane.b32.xlu0 %v573, 8
      %v1158 = vpop.permute.xlu0 %1157
      %1159 = vrot.lane.b32.xlu0 %v574, 8
      %v1160 = vpop.permute.xlu0 %1159
      %1161 = vrot.lane.b32.xlu0 %v575, 8
      %v1162 = vpop.permute.xlu0 %1161
      %1163 = vrot.lane.b32.xlu0 %v576, 8
      %v1164 = vpop.permute.xlu0 %1163
      %1165 = vrot.lane.b32.xlu0 %v577, 8
      %v1166 = vpop.permute.xlu0 %1165
      %1167 = vrot.lane.b32.xlu0 %v578, 8
      %v1168 = vpop.permute.xlu0 %1167
      %1169 = vrot.lane.b32.xlu0 %v579, 8
      %v1170 = vpop.permute.xlu0 %1169
      %1171 = vrot.lane.b32.xlu0 %v580, 8
      %v1172 = vpop.permute.xlu0 %1171
      %1173 = vrot.lane.b32.xlu0 %v581, 8
      %v1174 = vpop.permute.xlu0 %1173
      %1175 = vrot.lane.b32.xlu0 %v582, 8
      %v1176 = vpop.permute.xlu0 %1175
      %1177 = vrot.lane.b32.xlu0 %v583, 8
      %v1178 = vpop.permute.xlu0 %1177
      %1179 = vrot.lane.b32.xlu0 %v584, 8
      %v1180 = vpop.permute.xlu0 %1179
      %1181 = vrot.lane.b32.xlu0 %v585, 8
      %v1182 = vpop.permute.xlu0 %1181
      %1183 = vrot.lane.b32.xlu0 %v586, 8
      %v1184 = vpop.permute.xlu0 %1183
      %1185 = vrot.lane.b32.xlu0 %v587, 8
      %v1186 = vpop.permute.xlu0 %1185
      %1187 = vrot.lane.b32.xlu0 %v588, 8
      %v1188 = vpop.permute.xlu0 %1187
      %1222 = vrot.lane.b32.xlu0 %v721, 10
      %v1223 = vpop.permute.xlu0 %1222
      %1224 = vrot.lane.b32.xlu0 %v781, 10
      %v1225 = vpop.permute.xlu0 %1224
      %1226 = vrot.lane.b32.xlu0 %v724, 10
      %v1227 = vpop.permute.xlu0 %1226
      %1228 = vrot.lane.b32.xlu0 %v782, 10
      %v1229 = vpop.permute.xlu0 %1228
      %1230 = vrot.lane.b32.xlu0 %v727, 10
      %v1231 = vpop.permute.xlu0 %1230
      %1232 = vrot.lane.b32.xlu0 %v783, 10
      %v1233 = vpop.permute.xlu0 %1232
      %1234 = vrot.lane.b32.xlu0 %v730, 10
      %v1235 = vpop.permute.xlu0 %1234
      %1236 = vrot.lane.b32.xlu0 %v784, 10
      %v1237 = vpop.permute.xlu0 %1236
      %1238 = vrot.lane.b32.xlu0 %v733, 10
      %v1239 = vpop.permute.xlu0 %1238
      %1240 = vrot.lane.b32.xlu0 %v785, 10
      %v1241 = vpop.permute.xlu0 %1240
      %1242 = vrot.lane.b32.xlu0 %v736, 10
      %v1243 = vpop.permute.xlu0 %1242
      %1244 = vrot.lane.b32.xlu0 %v786, 10
      %v1245 = vpop.permute.xlu0 %1244
      %1246 = vrot.lane.b32.xlu0 %v739, 10
      %v1247 = vpop.permute.xlu0 %1246
      %1248 = vrot.lane.b32.xlu0 %v787, 10
      %v1249 = vpop.permute.xlu0 %1248
      %1250 = vrot.lane.b32.xlu0 %v742, 10
      %v1251 = vpop.permute.xlu0 %1250
      %1252 = vrot.lane.b32.xlu0 %v788, 10
      %v1253 = vpop.permute.xlu0 %1252
      %1254 = vrot.lane.b32.xlu0 %v745, 10
      %v1255 = vpop.permute.xlu0 %1254
      %1256 = vrot.lane.b32.xlu0 %v789, 10
      %v1257 = vpop.permute.xlu0 %1256
      %1258 = vrot.lane.b32.xlu0 %v748, 10
      %v1259 = vpop.permute.xlu0 %1258
      %1260 = vrot.lane.b32.xlu0 %v790, 10
      %v1261 = vpop.permute.xlu0 %1260
      %1262 = vrot.lane.b32.xlu0 %v751, 10
      %v1263 = vpop.permute.xlu0 %1262
      %1264 = vrot.lane.b32.xlu0 %v791, 10
      %v1265 = vpop.permute.xlu0 %1264
      %1266 = vrot.lane.b32.xlu0 %v754, 10
      %v1267 = vpop.permute.xlu0 %1266
      %1268 = vrot.lane.b32.xlu0 %v792, 10
      %v1269 = vpop.permute.xlu0 %1268
      %1270 = vrot.lane.b32.xlu0 %v757, 10
      %v1271 = vpop.permute.xlu0 %1270
      %1272 = vrot.lane.b32.xlu0 %v793, 10
      %v1273 = vpop.permute.xlu0 %1272
      %1274 = vrot.lane.b32.xlu0 %v760, 10
      %v1275 = vpop.permute.xlu0 %1274
      %1276 = vrot.lane.b32.xlu0 %v794, 10
      %v1277 = vpop.permute.xlu0 %1276
      %1278 = vrot.lane.b32.xlu0 %v763, 10
      %v1279 = vpop.permute.xlu0 %1278
      %1280 = vrot.lane.b32.xlu0 %v795, 10
      %v1281 = vpop.permute.xlu0 %1280
      %1282 = vrot.lane.b32.xlu0 %v805, 10
      %v1283 = vpop.permute.xlu0 %1282
      %1284 = vrot.lane.b32.xlu0 %v807, 10
      %v1285 = vpop.permute.xlu0 %1284
      %1319 = vrot.lane.b32.xlu0 %v702, 12
      %v1320 = vpop.permute.xlu0 %1319
      %1321 = vrot.lane.b32.xlu0 %v628, 12
      %v1322 = vpop.permute.xlu0 %1321
      %1323 = vrot.lane.b32.xlu0 %v703, 12
      %v1324 = vpop.permute.xlu0 %1323
      %1325 = vrot.lane.b32.xlu0 %v631, 12
      %v1326 = vpop.permute.xlu0 %1325
      %1327 = vrot.lane.b32.xlu0 %v704, 12
      %v1328 = vpop.permute.xlu0 %1327
      %1329 = vrot.lane.b32.xlu0 %v634, 12
      %v1330 = vpop.permute.xlu0 %1329
      %1331 = vrot.lane.b32.xlu0 %v705, 12
      %v1332 = vpop.permute.xlu0 %1331
      %1333 = vrot.lane.b32.xlu0 %v637, 12
      %v1334 = vpop.permute.xlu0 %1333
      %1335 = vrot.lane.b32.xlu0 %v706, 12
      %v1336 = vpop.permute.xlu0 %1335
      %1337 = vrot.lane.b32.xlu0 %v640, 12
      %v1338 = vpop.permute.xlu0 %1337
      %1339 = vrot.lane.b32.xlu0 %v707, 12
      %v1340 = vpop.permute.xlu0 %1339
      %1341 = vrot.lane.b32.xlu0 %v643, 12
      %v1342 = vpop.permute.xlu0 %1341
      %1343 = vrot.lane.b32.xlu0 %v708, 12
      %v1344 = vpop.permute.xlu0 %1343
      %1345 = vrot.lane.b32.xlu0 %v646, 12
      %v1346 = vpop.permute.xlu0 %1345
      %1347 = vrot.lane.b32.xlu0 %v709, 12
      %v1348 = vpop.permute.xlu0 %1347
      %1349 = vrot.lane.b32.xlu0 %v649, 12
      %v1350 = vpop.permute.xlu0 %1349
      %1351 = vrot.lane.b32.xlu0 %v710, 12
      %v1352 = vpop.permute.xlu0 %1351
      %1353 = vrot.lane.b32.xlu0 %v652, 12
      %v1354 = vpop.permute.xlu0 %1353
      %1355 = vrot.lane.b32.xlu0 %v711, 12
      %v1356 = vpop.permute.xlu0 %1355
      %1357 = vrot.lane.b32.xlu0 %v655, 12
      %v1358 = vpop.permute.xlu0 %1357
      %1359 = vrot.lane.b32.xlu0 %v712, 12
      %v1360 = vpop.permute.xlu0 %1359
      %1361 = vrot.lane.b32.xlu0 %v658, 12
      %v1362 = vpop.permute.xlu0 %1361
      %1363 = vrot.lane.b32.xlu0 %v713, 12
      %v1364 = vpop.permute.xlu0 %1363
      %1365 = vrot.lane.b32.xlu0 %v661, 12
      %v1366 = vpop.permute.xlu0 %1365
      %1367 = vrot.lane.b32.xlu0 %v714, 12
      %v1368 = vpop.permute.xlu0 %1367
      %1369 = vrot.lane.b32.xlu0 %v664, 12
      %v1370 = vpop.permute.xlu0 %1369
      %1371 = vrot.lane.b32.xlu0 %v715, 12
      %v1372 = vpop.permute.xlu0 %1371
      %1373 = vrot.lane.b32.xlu0 %v667, 12
      %v1374 = vpop.permute.xlu0 %1373
      %1375 = vrot.lane.b32.xlu0 %v802, 12
      %v1376 = vpop.permute.xlu0 %1375
      %1377 = vrot.lane.b32.xlu0 %v800, 12
      %v1378 = vpop.permute.xlu0 %1377
      %1379 = vrot.lane.b32.xlu0 %v700, 12
      %v1380 = vpop.permute.xlu0 %1379
      %1381 = vrot.lane.b32.xlu0 %v622, 12
      %v1382 = vpop.permute.xlu0 %1381
      %1415 = vrot.lane.b32.xlu0 %v559, 14
      %v1416 = vpop.permute.xlu0 %1415
      %1417 = vrot.lane.b32.xlu0 %v560, 14
      %v1418 = vpop.permute.xlu0 %1417
      %1419 = vrot.lane.b32.xlu0 %v561, 14
      %v1420 = vpop.permute.xlu0 %1419
      %1421 = vrot.lane.b32.xlu0 %v562, 14
      %v1422 = vpop.permute.xlu0 %1421
      %1423 = vrot.lane.b32.xlu0 %v563, 14
      %v1424 = vpop.permute.xlu0 %1423
      %1425 = vrot.lane.b32.xlu0 %v564, 14
      %v1426 = vpop.permute.xlu0 %1425
      %1427 = vrot.lane.b32.xlu0 %v565, 14
      %v1428 = vpop.permute.xlu0 %1427
      %1429 = vrot.lane.b32.xlu0 %v566, 14
      %v1430 = vpop.permute.xlu0 %1429
      %1431 = vrot.lane.b32.xlu0 %v567, 14
      %v1432 = vpop.permute.xlu0 %1431
      %1433 = vrot.lane.b32.xlu0 %v568, 14
      %v1434 = vpop.permute.xlu0 %1433
      %1435 = vrot.lane.b32.xlu0 %v569, 14
      %v1436 = vpop.permute.xlu0 %1435
      %1437 = vrot.lane.b32.xlu0 %v570, 14
      %v1438 = vpop.permute.xlu0 %1437
      %1439 = vrot.lane.b32.xlu0 %v571, 14
      %v1440 = vpop.permute.xlu0 %1439
      %1441 = vrot.lane.b32.xlu0 %v572, 14
      %v1442 = vpop.permute.xlu0 %1441
      %1443 = vrot.lane.b32.xlu0 %v573, 14
      %v1444 = vpop.permute.xlu0 %1443
      %1445 = vrot.lane.b32.xlu0 %v574, 14
      %v1446 = vpop.permute.xlu0 %1445
      %1447 = vrot.lane.b32.xlu0 %v575, 14
      %v1448 = vpop.permute.xlu0 %1447
      %1449 = vrot.lane.b32.xlu0 %v576, 14
      %v1450 = vpop.permute.xlu0 %1449
      %1451 = vrot.lane.b32.xlu0 %v577, 14
      %v1452 = vpop.permute.xlu0 %1451
      %1453 = vrot.lane.b32.xlu0 %v578, 14
      %v1454 = vpop.permute.xlu0 %1453
      %1455 = vrot.lane.b32.xlu0 %v579, 14
      %v1456 = vpop.permute.xlu0 %1455
      %1457 = vrot.lane.b32.xlu0 %v580, 14
      %v1458 = vpop.permute.xlu0 %1457
      %1459 = vrot.lane.b32.xlu0 %v581, 14
      %v1460 = vpop.permute.xlu0 %1459
      %1461 = vrot.lane.b32.xlu0 %v582, 14
      %v1462 = vpop.permute.xlu0 %1461
      %1463 = vrot.lane.b32.xlu0 %v583, 14
      %v1464 = vpop.permute.xlu0 %1463
      %1465 = vrot.lane.b32.xlu0 %v584, 14
      %v1466 = vpop.permute.xlu0 %1465
      %1467 = vrot.lane.b32.xlu0 %v585, 14
      %v1468 = vpop.permute.xlu0 %1467
      %1469 = vrot.lane.b32.xlu0 %v586, 14
      %v1470 = vpop.permute.xlu0 %1469
      %1471 = vrot.lane.b32.xlu0 %v587, 14
      %v1472 = vpop.permute.xlu0 %1471
      %1473 = vrot.lane.b32.xlu0 %v588, 14
      %v1474 = vpop.permute.xlu0 %1473
      %1475 = vrot.lane.b32.xlu0 0.0, 14
      %v1476 = vpop.permute.xlu0 %1475
      %1508 = vrot.lane.b32.xlu0 %v724, 16
      %v1509 = vpop.permute.xlu0 %1508
      %1510 = vrot.lane.b32.xlu0 %v782, 16
      %v1511 = vpop.permute.xlu0 %1510
      %1512 = vrot.lane.b32.xlu0 %v727, 16
      %v1513 = vpop.permute.xlu0 %1512
      %1514 = vrot.lane.b32.xlu0 %v783, 16
      %v1515 = vpop.permute.xlu0 %1514
      %1516 = vrot.lane.b32.xlu0 %v730, 16
      %v1517 = vpop.permute.xlu0 %1516
      %1518 = vrot.lane.b32.xlu0 %v784, 16
      %v1519 = vpop.permute.xlu0 %1518
      %1520 = vrot.lane.b32.xlu0 %v733, 16
      %v1521 = vpop.permute.xlu0 %1520
      %1522 = vrot.lane.b32.xlu0 %v785, 16
      %v1523 = vpop.permute.xlu0 %1522
      %1524 = vrot.lane.b32.xlu0 %v736, 16
      %v1525 = vpop.permute.xlu0 %1524
      %1526 = vrot.lane.b32.xlu0 %v786, 16
      %v1527 = vpop.permute.xlu0 %1526
      %1528 = vrot.lane.b32.xlu0 %v739, 16
      %v1529 = vpop.permute.xlu0 %1528
      %1530 = vrot.lane.b32.xlu0 %v787, 16
      %v1531 = vpop.permute.xlu0 %1530
      %1532 = vrot.lane.b32.xlu0 %v742, 16
      %v1533 = vpop.permute.xlu0 %1532
      %1534 = vrot.lane.b32.xlu0 %v788, 16
      %v1535 = vpop.permute.xlu0 %1534
      %1536 = vrot.lane.b32.xlu0 %v745, 16
      %v1537 = vpop.permute.xlu0 %1536
      %1538 = vrot.lane.b32.xlu0 %v789, 16
      %v1539 = vpop.permute.xlu0 %1538
      %1540 = vrot.lane.b32.xlu0 %v748, 16
      %v1541 = vpop.permute.xlu0 %1540
      %1542 = vrot.lane.b32.xlu0 %v790, 16
      %v1543 = vpop.permute.xlu0 %1542
      %1544 = vrot.lane.b32.xlu0 %v751, 16
      %v1545 = vpop.permute.xlu0 %1544
      %1546 = vrot.lane.b32.xlu0 %v791, 16
      %v1547 = vpop.permute.xlu0 %1546
      %1548 = vrot.lane.b32.xlu0 %v754, 16
      %v1549 = vpop.permute.xlu0 %1548
      %1550 = vrot.lane.b32.xlu0 %v792, 16
      %v1551 = vpop.permute.xlu0 %1550
      %1552 = vrot.lane.b32.xlu0 %v757, 16
      %v1553 = vpop.permute.xlu0 %1552
      %1554 = vrot.lane.b32.xlu0 %v793, 16
      %v1555 = vpop.permute.xlu0 %1554
      %1556 = vrot.lane.b32.xlu0 %v760, 16
      %v1557 = vpop.permute.xlu0 %1556
      %1558 = vrot.lane.b32.xlu0 %v794, 16
      %v1559 = vpop.permute.xlu0 %1558
      %1560 = vrot.lane.b32.xlu0 %v763, 16
      %v1561 = vpop.permute.xlu0 %1560
      %1562 = vrot.lane.b32.xlu0 %v795, 16
      %v1563 = vpop.permute.xlu0 %1562
      %1564 = vrot.lane.b32.xlu0 %v805, 16
      %v1565 = vpop.permute.xlu0 %1564
      %1566 = vrot.lane.b32.xlu0 %v807, 16
      %v1567 = vpop.permute.xlu0 %1566
      %1568 = vrot.lane.b32.xlu0 %v718, 16
      %v1569 = vpop.permute.xlu0 %1568
      %1570 = vrot.lane.b32.xlu0 %v780, 16
      %v1571 = vpop.permute.xlu0 %1570
      %vm1604 = vcmask 15360
      %v1605 = vsel %vm1604, %v700, %v809
      %v1606 = vsel %vm1604, %v622, %v809
      %v1607 = vsel %vm1604, %v701, %v811
      %v1608 = vsel %vm1604, %v625, %v813
      %v1609 = vsel %vm1604, %v702, %v815
      %v1610 = vsel %vm1604, %v628, %v817
      %v1611 = vsel %vm1604, %v703, %v819
      %v1612 = vsel %vm1604, %v631, %v821
      %v1613 = vsel %vm1604, %v704, %v823
      %v1614 = vsel %vm1604, %v634, %v825
      %v1615 = vsel %vm1604, %v705, %v827
      %v1616 = vsel %vm1604, %v637, %v829
      %v1617 = vsel %vm1604, %v706, %v831
      %v1618 = vsel %vm1604, %v640, %v833
      %v1619 = vsel %vm1604, %v707, %v835
      %v1620 = vsel %vm1604, %v643, %v837
      %v1621 = vsel %vm1604, %v708, %v839
      %v1622 = vsel %vm1604, %v646, %v841
      %v1623 = vsel %vm1604, %v709, %v843
      %v1624 = vsel %vm1604, %v649, %v845
      %v1625 = vsel %vm1604, %v710, %v847
      %v1626 = vsel %vm1604, %v652, %v849
      %v1627 = vsel %vm1604, %v711, %v851
      %v1628 = vsel %vm1604, %v655, %v853
      %v1629 = vsel %vm1604, %v712, %v855
      %v1630 = vsel %vm1604, %v658, %v857
      %v1631 = vsel %vm1604, %v713, %v859
      %v1632 = vsel %vm1604, %v661, %v861
      %v1633 = vsel %vm1604, %v714, %v863
      %v1634 = vsel %vm1604, %v664, %v865
      %v1635 = vsel %vm1604, %v715, %v867
      %v1636 = vsel %vm1604, %v667, %v869
      %v1637 = vsel %vm231, %v1605, %v918
      %v1638 = vsel %vm231, %v1606, %v920
      %v1639 = vsel %vm231, %v1607, %v922
      %v1640 = vsel %vm231, %v1608, %v924
      %v1641 = vsel %vm231, %v1609, %v926
      %v1642 = vsel %vm231, %v1610, %v928
      %v1643 = vsel %vm231, %v1611, %v930
      %v1644 = vsel %vm231, %v1612, %v932
      %v1645 = vsel %vm231, %v1613, %v934
      %v1646 = vsel %vm231, %v1614, %v936
      %v1647 = vsel %vm231, %v1615, %v938
      %v1648 = vsel %vm231, %v1616, %v940
      %v1649 = vsel %vm231, %v1617, %v942
      %v1650 = vsel %vm231, %v1618, %v944
      %v1651 = vsel %vm231, %v1619, %v946
      %v1652 = vsel %vm231, %v1620, %v948
      %v1653 = vsel %vm231, %v1621, %v950
      %v1654 = vsel %vm231, %v1622, %v952
      %v1655 = vsel %vm231, %v1623, %v954
      %v1656 = vsel %vm231, %v1624, %v956
      %v1657 = vsel %vm231, %v1625, %v958
      %v1658 = vsel %vm231, %v1626, %v960
      %v1659 = vsel %vm231, %v1627, %v962
      %v1660 = vsel %vm231, %v1628, %v964
      %v1661 = vsel %vm231, %v1629, %v966
      %v1662 = vsel %vm231, %v1630, %v968
      %v1663 = vsel %vm231, %v1631, %v970
      %v1664 = vsel %vm231, %v1632, %v972
      %v1665 = vsel %vm231, %v1633, %v974
      %v1666 = vsel %vm231, %v1634, %v976
      %v1667 = vsel %vm231, %v1635, %v978
      %v1668 = vsel %vm231, %v1636, %v980
      %vm1669 = vcmask 48128
      %v1670 = vsel %vm1669, %v1637, %v1030
      %v1671 = vsel %vm1669, %v1638, %v1032
      %v1672 = vsel %vm1669, %v1639, %v1034
      %v1673 = vsel %vm1669, %v1640, %v1036
      %v1674 = vsel %vm1669, %v1641, %v1038
      %v1675 = vsel %vm1669, %v1642, %v1040
      %v1676 = vsel %vm1669, %v1643, %v1042
      %v1677 = vsel %vm1669, %v1644, %v1044
      %v1678 = vsel %vm1669, %v1645, %v1046
      %v1679 = vsel %vm1669, %v1646, %v1048
      %v1680 = vsel %vm1669, %v1647, %v1050
      %v1681 = vsel %vm1669, %v1648, %v1052
      %v1682 = vsel %vm1669, %v1649, %v1054
      %v1683 = vsel %vm1669, %v1650, %v1056
      %v1684 = vsel %vm1669, %v1651, %v1058
      %v1685 = vsel %vm1669, %v1652, %v1060
      %v1686 = vsel %vm1669, %v1653, %v1062
      %v1687 = vsel %vm1669, %v1654, %v1064
      %v1688 = vsel %vm1669, %v1655, %v1066
      %v1689 = vsel %vm1669, %v1656, %v1068
      %v1690 = vsel %vm1669, %v1657, %v1070
      %v1691 = vsel %vm1669, %v1658, %v1072
      %v1692 = vsel %vm1669, %v1659, %v1074
      %v1693 = vsel %vm1669, %v1660, %v1076
      %v1694 = vsel %vm1669, %v1661, %v1078
      %v1695 = vsel %vm1669, %v1662, %v1080
      %v1696 = vsel %vm1669, %v1663, %v1082
      %v1697 = vsel %vm1669, %v1664, %v1084
      %v1698 = vsel %vm1669, %v1665, %v1086
      %v1699 = vsel %vm1669, %v1666, %v1088
      %v1700 = vsel %vm1669, %v1667, %v1090
      %v1701 = vsel %vm1669, %v1668, %v1092
      %vm1702 = vcmask 64512
      %v1703 = vsel %vm1702, %v1670, %v1126
      %v1704 = vsel %vm1702, %v1671, %v1128
      %v1705 = vsel %vm1702, %v1672, %v1130
      %v1706 = vsel %vm1702, %v1673, %v1132
      %v1707 = vsel %vm1702, %v1674, %v1134
      %v1708 = vsel %vm1702, %v1675, %v1136
      %v1709 = vsel %vm1702, %v1676, %v1138
      %v1710 = vsel %vm1702, %v1677, %v1140
      %v1711 = vsel %vm1702, %v1678, %v1142
      %v1712 = vsel %vm1702, %v1679, %v1144
      %v1713 = vsel %vm1702, %v1680, %v1146
      %v1714 = vsel %vm1702, %v1681, %v1148
      %v1715 = vsel %vm1702, %v1682, %v1150
      %v1716 = vsel %vm1702, %v1683, %v1152
      %v1717 = vsel %vm1702, %v1684, %v1154
      %v1718 = vsel %vm1702, %v1685, %v1156
      %v1719 = vsel %vm1702, %v1686, %v1158
      %v1720 = vsel %vm1702, %v1687, %v1160
      %v1721 = vsel %vm1702, %v1688, %v1162
      %v1722 = vsel %vm1702, %v1689, %v1164
      %v1723 = vsel %vm1702, %v1690, %v1166
      %v1724 = vsel %vm1702, %v1691, %v1168
      %v1725 = vsel %vm1702, %v1692, %v1170
      %v1726 = vsel %vm1702, %v1693, %v1172
      %v1727 = vsel %vm1702, %v1694, %v1174
      %v1728 = vsel %vm1702, %v1695, %v1176
      %v1729 = vsel %vm1702, %v1696, %v1178
      %v1730 = vsel %vm1702, %v1697, %v1180
      %v1731 = vsel %vm1702, %v1698, %v1182
      %v1732 = vsel %vm1702, %v1699, %v1184
      %v1733 = vsel %vm1702, %v1700, %v1186
      %v1734 = vsel %vm1702, %v1701, %v1188
      %vm1735 = vcmask 80896
      %v1736 = vsel %vm1735, %v1703, %v1223
      %v1737 = vsel %vm1735, %v1704, %v1225
      %v1738 = vsel %vm1735, %v1705, %v1227
      %v1739 = vsel %vm1735, %v1706, %v1229
      %v1740 = vsel %vm1735, %v1707, %v1231
      %v1741 = vsel %vm1735, %v1708, %v1233
      %v1742 = vsel %vm1735, %v1709, %v1235
      %v1743 = vsel %vm1735, %v1710, %v1237
      %v1744 = vsel %vm1735, %v1711, %v1239
      %v1745 = vsel %vm1735, %v1712, %v1241
      %v1746 = vsel %vm1735, %v1713, %v1243
      %v1747 = vsel %vm1735, %v1714, %v1245
      %v1748 = vsel %vm1735, %v1715, %v1247
      %v1749 = vsel %vm1735, %v1716, %v1249
      %v1750 = vsel %vm1735, %v1717, %v1251
      %v1751 = vsel %vm1735, %v1718, %v1253
      %v1752 = vsel %vm1735, %v1719, %v1255
      %v1753 = vsel %vm1735, %v1720, %v1257
      %v1754 = vsel %vm1735, %v1721, %v1259
      %v1755 = vsel %vm1735, %v1722, %v1261
      %v1756 = vsel %vm1735, %v1723, %v1263
      %v1757 = vsel %vm1735, %v1724, %v1265
      %v1758 = vsel %vm1735, %v1725, %v1267
      %v1759 = vsel %vm1735, %v1726, %v1269
      %v1760 = vsel %vm1735, %v1727, %v1271
      %v1761 = vsel %vm1735, %v1728, %v1273
      %v1762 = vsel %vm1735, %v1729, %v1275
      %v1763 = vsel %vm1735, %v1730, %v1277
      %v1764 = vsel %vm1735, %v1731, %v1279
      %v1765 = vsel %vm1735, %v1732, %v1281
      %v1766 = vsel %vm1735, %v1733, %v1283
      %v1767 = vsel %vm1735, %v1734, %v1285
      %vm1768 = vcmask 97280
      %v1769 = vsel %vm1768, %v1736, %v1320
      %v1770 = vsel %vm1768, %v1737, %v1322
      %v1771 = vsel %vm1768, %v1738, %v1324
      %v1772 = vsel %vm1768, %v1739, %v1326
      %v1773 = vsel %vm1768, %v1740, %v1328
      %v1774 = vsel %vm1768, %v1741, %v1330
      %v1775 = vsel %vm1768, %v1742, %v1332
      %v1776 = vsel %vm1768, %v1743, %v1334
      %v1777 = vsel %vm1768, %v1744, %v1336
      %v1778 = vsel %vm1768, %v1745, %v1338
      %v1779 = vsel %vm1768, %v1746, %v1340
      %v1780 = vsel %vm1768, %v1747, %v1342
      %v1781 = vsel %vm1768, %v1748, %v1344
      %v1782 = vsel %vm1768, %v1749, %v1346
      %v1783 = vsel %vm1768, %v1750, %v1348
      %v1784 = vsel %vm1768, %v1751, %v1350
      %v1785 = vsel %vm1768, %v1752, %v1352
      %v1786 = vsel %vm1768, %v1753, %v1354
      %v1787 = vsel %vm1768, %v1754, %v1356
      %v1788 = vsel %vm1768, %v1755, %v1358
      %v1789 = vsel %vm1768, %v1756, %v1360
      %v1790 = vsel %vm1768, %v1757, %v1362
      %v1791 = vsel %vm1768, %v1758, %v1364
      %v1792 = vsel %vm1768, %v1759, %v1366
      %v1793 = vsel %vm1768, %v1760, %v1368
      %v1794 = vsel %vm1768, %v1761, %v1370
      %v1795 = vsel %vm1768, %v1762, %v1372
      %v1796 = vsel %vm1768, %v1763, %v1374
      %v1797 = vsel %vm1768, %v1764, %v1376
      %v1798 = vsel %vm1768, %v1765, %v1378
      %v1799 = vsel %vm1768, %v1766, %v1380
      %v1800 = vsel %vm1768, %v1767, %v1382
      %vm1801 = vcmask 113664
      %v1802 = vsel %vm1801, %v1769, %v1416
      %v1803 = vsel %vm1801, %v1770, %v1418
      %v1804 = vsel %vm1801, %v1771, %v1420
      %v1805 = vsel %vm1801, %v1772, %v1422
      %v1806 = vsel %vm1801, %v1773, %v1424
      %v1807 = vsel %vm1801, %v1774, %v1426
      %v1808 = vsel %vm1801, %v1775, %v1428
      %v1809 = vsel %vm1801, %v1776, %v1430
      %v1810 = vsel %vm1801, %v1777, %v1432
      %v1811 = vsel %vm1801, %v1778, %v1434
      %v1812 = vsel %vm1801, %v1779, %v1436
      %v1813 = vsel %vm1801, %v1780, %v1438
      %v1814 = vsel %vm1801, %v1781, %v1440
      %v1815 = vsel %vm1801, %v1782, %v1442
      %v1816 = vsel %vm1801, %v1783, %v1444
      %v1817 = vsel %vm1801, %v1784, %v1446
      %v1818 = vsel %vm1801, %v1785, %v1448
      %v1819 = vsel %vm1801, %v1786, %v1450
      %v1820 = vsel %vm1801, %v1787, %v1452
      %v1821 = vsel %vm1801, %v1788, %v1454
      %v1822 = vsel %vm1801, %v1789, %v1456
      %v1823 = vsel %vm1801, %v1790, %v1458
      %v1824 = vsel %vm1801, %v1791, %v1460
      %v1825 = vsel %vm1801, %v1792, %v1462
      %v1826 = vsel %vm1801, %v1793, %v1464
      %v1827 = vsel %vm1801, %v1794, %v1466
      %v1828 = vsel %vm1801, %v1795, %v1468
      %v1829 = vsel %vm1801, %v1796, %v1470
      %v1830 = vsel %vm1801, %v1797, %v1472
      %v1831 = vsel %vm1801, %v1798, %v1474
      %v1832 = vsel %vm1801, %v1799, %v1476
      %v1833 = vsel %vm1801, %v1800, %v1476
      %vm1834 = vcmask 130048
      %v1835 = vsel %vm1834, %v1802, %v1509
      %v1836 = vsel %vm1834, %v1803, %v1511
      %v1837 = vsel %vm1834, %v1804, %v1513
      %v1838 = vsel %vm1834, %v1805, %v1515
      %v1839 = vsel %vm1834, %v1806, %v1517
      %v1840 = vsel %vm1834, %v1807, %v1519
      %v1841 = vsel %vm1834, %v1808, %v1521
      %v1842 = vsel %vm1834, %v1809, %v1523
      %v1843 = vsel %vm1834, %v1810, %v1525
      %v1844 = vsel %vm1834, %v1811, %v1527
      %v1845 = vsel %vm1834, %v1812, %v1529
      %v1846 = vsel %vm1834, %v1813, %v1531
      %v1847 = vsel %vm1834, %v1814, %v1533
      %v1848 = vsel %vm1834, %v1815, %v1535
      %v1849 = vsel %vm1834, %v1816, %v1537
      %v1850 = vsel %vm1834, %v1817, %v1539
      %v1851 = vsel %vm1834, %v1818, %v1541
      %v1852 = vsel %vm1834, %v1819, %v1543
      %v1853 = vsel %vm1834, %v1820, %v1545
      %v1854 = vsel %vm1834, %v1821, %v1547
      %v1855 = vsel %vm1834, %v1822, %v1549
      %v1856 = vsel %vm1834, %v1823, %v1551
      %v1857 = vsel %vm1834, %v1824, %v1553
      %v1858 = vsel %vm1834, %v1825, %v1555
      %v1859 = vsel %vm1834, %v1826, %v1557
      %v1860 = vsel %vm1834, %v1827, %v1559
      %v1861 = vsel %vm1834, %v1828, %v1561
      %v1862 = vsel %vm1834, %v1829, %v1563
      %v1863 = vsel %vm1834, %v1830, %v1565
      %v1864 = vsel %vm1834, %v1831, %v1567
      %v1865 = vsel %vm1834, %v1832, %v1569
      %v1866 = vsel %vm1834, %v1833, %v1571
      %v1867 = vld [vmem:[%s2] sm:$0xff]
      %v1868 = vld [vmem:[%s2 + $0x8] sm:$0xff]
      %v1869 = vld [vmem:[%s2 + $0x10] sm:$0x3]
      %v1870 = vld [vmem:[%s3] sm:$0x1]
      %v1872 = vlaneseq
      %v1873 = vshrl.u32 %v1872, 7
      %v1874 = vsub.s32 0, %v1873
      %v1875 = vrot.slane %v1870, %v1874
      %vm1877 = vcmask 146432
      %v1879 = vsel %vm1877, %v1835, 0
      %v1882 = vsel %vm1877, %v1836, 0
      %v1885 = vsel %vm1877, %v1837, 0
      %v1888 = vsel %vm1877, %v1838, 0
      %v1891 = vsel %vm1877, %v1839, 0
      %v1894 = vsel %vm1877, %v1840, 0
      %v1897 = vsel %vm1877, %v1841, 0
      %v1900 = vsel %vm1877, %v1842, 0
      %v1903 = vsel %vm1877, %v1843, 0
      %v1906 = vsel %vm1877, %v1844, 0
      %v1909 = vsel %vm1877, %v1845, 0
      %v1912 = vsel %vm1877, %v1846, 0
      %v1915 = vsel %vm1877, %v1847, 0
      %v1918 = vsel %vm1877, %v1848, 0
      %v1921 = vsel %vm1877, %v1849, 0
      %v1924 = vsel %vm1877, %v1850, 0
      %v1927 = vsel %vm1877, %v1851, 0
      %v1930 = vsel %vm1877, %v1852, 0
      %v1933 = vsel %vm1877, %v1853, 0
      %v1936 = vsel %vm1877, %v1854, 0
      %v1939 = vsel %vm1877, %v1855, 0
      %v1942 = vsel %vm1877, %v1856, 0
      %v1945 = vsel %vm1877, %v1857, 0
      %v1948 = vsel %vm1877, %v1858, 0
      %v1951 = vsel %vm1877, %v1859, 0
      %v1954 = vsel %vm1877, %v1860, 0
      %v1957 = vsel %vm1877, %v1861, 0
      %v1960 = vsel %vm1877, %v1862, 0
      %v1963 = vsel %vm1877, %v1863, 0
      %v1966 = vsel %vm1877, %v1864, 0
      %v1969 = vsel %vm1877, %v1865, 0
      %v1972 = vsel %vm1877, %v1866, 0
      %vm1974 = vcmask 1041408
      %v1976 = vsel %vm1974, %v1869, 0
      %1978 = vmatprep.subr.mxu0 0.0
      %1979 = vmatpush1.msra.mxu0 %v1867
      %1980 = vmatprep.subr.mxu0 0.0
      %1981 = vmatpush1.msra.mxu0 %v1868
      %1982 = vmatprep.subr.mxu0 0.0
      %1983 = vmatpush1.msra.mxu0 %v1976
      %1984 = vmatprep.subr.mxu0 0.0
      %1985 = vmatpush1.msra.mxu0 0.0
      %1986 = vmatprep.subr.mxu0 0.0
      %1987 = vmatpush1.msra.mxu0 0.0
      %1988 = vmatprep.subr.mxu0 0.0
      %1989 = vmatpush1.msra.mxu0 0.0
      %1990 = vmatprep.subr.mxu0 0.0
      %1991 = vmatpush1.msra.mxu0 0.0
      %1992 = vmatprep.subr.mxu0 0.0
      %1993 = vmatpush1.msra.mxu0 0.0
      %1994 = vmatprep.subr.mxu0 0.0
      %1995 = vmatpush1.msra.mxu0 0.0
      %1996 = vmatprep.subr.mxu0 0.0
      %1997 = vmatpush1.msra.mxu0 0.0
      %1998 = vmatprep.subr.mxu0 0.0
      %1999 = vmatpush1.msra.mxu0 0.0
      %2000 = vmatprep.subr.mxu0 0.0
      %2001 = vmatpush1.msra.mxu0 0.0
      %2002 = vmatprep.subr.mxu0 0.0
      %2003 = vmatpush1.msra.mxu0 0.0
      %2004 = vmatprep.subr.mxu0 0.0
      %2005 = vmatpush1.msra.mxu0 0.0
      %2006 = vmatprep.subr.mxu0 0.0
      %2007 = vmatpush1.msra.mxu0 0.0
      %2008 = vmatprep.subr.mxu0 0.0
      %2009 = vmatpush1.msra.mxu0 0.0
      %2010 = vmatprep.subr.mxu0 0.0
      %2011 = vmatpush1.msra.mxu0 0.0
      %2012 = vmatprep.subr.mxu0 0.0
      %2013 = vmatpush1.msra.mxu0 0.0
      %2014 = vmatprep.subr.mxu0 0.0
      %2015 = vmatpush1.msra.mxu0 0.0
      %2016 = vmatprep.subr.mxu0 0.0
      %2017 = vmatpush1.msra.mxu0 0.0
      %2018 = vmatprep.subr.mxu0 0.0
      %2019 = vmatpush1.msra.mxu0 0.0
      %2020 = vmatprep.subr.mxu0 0.0
      %2021 = vmatpush1.msra.mxu0 0.0
      %2022 = vmatprep.subr.mxu0 0.0
      %2023 = vmatpush1.msra.mxu0 0.0
      %2024 = vmatprep.subr.mxu0 0.0
      %2025 = vmatpush1.msra.mxu0 0.0
      %2026 = vmatprep.subr.mxu0 0.0
      %2027 = vmatpush1.msra.mxu0 0.0
      %2028 = vmatprep.subr.mxu0 0.0
      %2029 = vmatpush1.msra.mxu0 0.0
      %2030 = vmatprep.subr.mxu0 0.0
      %2031 = vmatpush1.msra.mxu0 0.0
      %2032 = vmatprep.subr.mxu0 0.0
      %2033 = vmatpush1.msra.mxu0 0.0
      %2034 = vmatprep.subr.mxu0 0.0
      %2035 = vmatpush1.msra.mxu0 0.0
      %2036 = vmatprep.subr.mxu0 0.0
      %2037 = vmatpush1.msra.mxu0 0.0
      %2038 = vmatprep.subr.mxu0 0.0
      %2039 = vmatpush1.msra.mxu0 0.0
      %2040 = vmatprep.subr.mxu0 0.0
      %2041 = vmatpush1.msra.mxu0 0.0
      %2042 = vmatprep.mubr.f32.mxu0 0.0
      %2043 = vmatmul.mubr.f32.gmra.mrb[0].mxu0 %v1879
      %v2044 = vpop.f32.mrb[0].mxu0
      %v2045 = vadd.f32 %v1875, %v2044
      %v2046 = vpop.f32.mrb[0].mxu0
      %2047 = vmatprep.mubr.f32.mxu0 0.0
      %2048 = vmatmul.mubr.f32.gmra.mrb[0].mxu0 %v1882
      %v2049 = vpop.f32.mrb[0].mxu0
      %v2050 = vadd.f32 %v1875, %v2049
      %v2051 = vpop.f32.mrb[0].mxu0
      %2052 = vmatprep.mubr.f32.mxu0 0.0
      %2053 = vmatmul.mubr.f32.gmra.mrb[0].mxu0 %v1885
      %v2054 = vpop.f32.mrb[0].mxu0
      %v2055 = vadd.f32 %v1875, %v2054
      %v2056 = vpop.f32.mrb[0].mxu0
      %2057 = vmatprep.mubr.f32.mxu0 0.0
      %2058 = vmatmul.mubr.f32.gmra.mrb[0].mxu0 %v1888
      %v2059 = vpop.f32.mrb[0].mxu0
      %v2060 = vadd.f32 %v1875, %v2059
      %v2061 = vpop.f32.mrb[0].mxu0
      %2062 = vmatprep.mubr.f32.mxu0 0.0
      %2063 = vmatmul.mubr.f32.gmra.mrb[0].mxu0 %v1891
      %v2064 = vpop.f32.mrb[0].mxu0
      %v2065 = vadd.f32 %v1875, %v2064
      %v2066 = vpop.f32.mrb[0].mxu0
      %2067 = vmatprep.mubr.f32.mxu0 0.0
      %2068 = vmatmul.mubr.f32.gmra.mrb[0].mxu0 %v1894
      %v2069 = vpop.f32.mrb[0].mxu0
      %v2070 = vadd.f32 %v1875, %v2069
      %v2071 = vpop.f32.mrb[0].mxu0
      %2072 = vmatprep.mubr.f32.mxu0 0.0
      %2073 = vmatmul.mubr.f32.gmra.mrb[0].mxu0 %v1897
      %v2074 = vpop.f32.mrb[0].mxu0
      %v2075 = vadd.f32 %v1875, %v2074
      %v2076 = vpop.f32.mrb[0].mxu0
      %2077 = vmatprep.mubr.f32.mxu0 0.0
      %2078 = vmatmul.mubr.f32.gmra.mrb[0].mxu0 %v1900
      %v2079 = vpop.f32.mrb[0].mxu0
      %v2080 = vadd.f32 %v1875, %v2079
      %v2081 = vpop.f32.mrb[0].mxu0
      %2082 = vmatprep.mubr.f32.mxu0 0.0
      %2083 = vmatmul.mubr.f32.gmra.mrb[0].mxu0 %v1903
      %v2084 = vpop.f32.mrb[0].mxu0
      %v2085 = vadd.f32 %v1875, %v2084
      %v2086 = vpop.f32.mrb[0].mxu0
      %2087 = vmatprep.mubr.f32.mxu0 0.0
      %2088 = vmatmul.mubr.f32.gmra.mrb[0].mxu0 %v1906
      %v2089 = vpop.f32.mrb[0].mxu0
      %v2090 = vadd.f32 %v1875, %v2089
      %v2091 = vpop.f32.mrb[0].mxu0
      %2092 = vmatprep.mubr.f32.mxu0 0.0
      %2093 = vmatmul.mubr.f32.gmra.mrb[0].mxu0 %v1909
      %v2094 = vpop.f32.mrb[0].mxu0
      %v2095 = vadd.f32 %v1875, %v2094
      %v2096 = vpop.f32.mrb[0].mxu0
      %2097 = vmatprep.mubr.f32.mxu0 0.0
      %2098 = vmatmul.mubr.f32.gmra.mrb[0].mxu0 %v1912
      %v2099 = vpop.f32.mrb[0].mxu0
      %v2100 = vadd.f32 %v1875, %v2099
      %v2101 = vpop.f32.mrb[0].mxu0
      %2102 = vmatprep.mubr.f32.mxu0 0.0
      %2103 = vmatmul.mubr.f32.gmra.mrb[0].mxu0 %v1915
      %v2104 = vpop.f32.mrb[0].mxu0
      %v2105 = vadd.f32 %v1875, %v2104
      %v2106 = vpop.f32.mrb[0].mxu0
      %2107 = vmatprep.mubr.f32.mxu0 0.0
      %2108 = vmatmul.mubr.f32.gmra.mrb[0].mxu0 %v1918
      %v2109 = vpop.f32.mrb[0].mxu0
      %v2110 = vadd.f32 %v1875, %v2109
      %v2111 = vpop.f32.mrb[0].mxu0
      %2112 = vmatprep.mubr.f32.mxu0 0.0
      %2113 = vmatmul.mubr.f32.gmra.mrb[0].mxu0 %v1921
      %v2114 = vpop.f32.mrb[0].mxu0
      %v2115 = vadd.f32 %v1875, %v2114
      %v2116 = vpop.f32.mrb[0].mxu0
      %2117 = vmatprep.mubr.f32.mxu0 0.0
      %2118 = vmatmul.mubr.f32.gmra.mrb[0].mxu0 %v1924
      %v2119 = vpop.f32.mrb[0].mxu0
      %v2120 = vadd.f32 %v1875, %v2119
      %v2121 = vpop.f32.mrb[0].mxu0
      %2122 = vmatprep.mubr.f32.mxu0 0.0
      %2123 = vmatmul.mubr.f32.gmra.mrb[0].mxu0 %v1927
      %v2124 = vpop.f32.mrb[0].mxu0
      %v2125 = vadd.f32 %v1875, %v2124
      %v2126 = vpop.f32.mrb[0].mxu0
      %2127 = vmatprep.mubr.f32.mxu0 0.0
      %2128 = vmatmul.mubr.f32.gmra.mrb[0].mxu0 %v1930
      %v2129 = vpop.f32.mrb[0].mxu0
      %v2130 = vadd.f32 %v1875, %v2129
      %v2131 = vpop.f32.mrb[0].mxu0
      %2132 = vmatprep.mubr.f32.mxu0 0.0
      %2133 = vmatmul.mubr.f32.gmra.mrb[0].mxu0 %v1933
      %v2134 = vpop.f32.mrb[0].mxu0
      %v2135 = vadd.f32 %v1875, %v2134
      %v2136 = vpop.f32.mrb[0].mxu0
      %2137 = vmatprep.mubr.f32.mxu0 0.0
      %2138 = vmatmul.mubr.f32.gmra.mrb[0].mxu0 %v1936
      %v2139 = vpop.f32.mrb[0].mxu0
      %v2140 = vadd.f32 %v1875, %v2139
      %v2141 = vpop.f32.mrb[0].mxu0
      %2142 = vmatprep.mubr.f32.mxu0 0.0
      %2143 = vmatmul.mubr.f32.gmra.mrb[0].mxu0 %v1939
      %v2144 = vpop.f32.mrb[0].mxu0
      %v2145 = vadd.f32 %v1875, %v2144
      %v2146 = vpop.f32.mrb[0].mxu0
      %2147 = vmatprep.mubr.f32.mxu0 0.0
      %2148 = vmatmul.mubr.f32.gmra.mrb[0].mxu0 %v1942
      %v2149 = vpop.f32.mrb[0].mxu0
      %v2150 = vadd.f32 %v1875, %v2149
      %v2151 = vpop.f32.mrb[0].mxu0
      %2152 = vmatprep.mubr.f32.mxu0 0.0
      %2153 = vmatmul.mubr.f32.gmra.mrb[0].mxu0 %v1945
      %v2154 = vpop.f32.mrb[0].mxu0
      %v2155 = vadd.f32 %v1875, %v2154
      %v2156 = vpop.f32.mrb[0].mxu0
      %2157 = vmatprep.mubr.f32.mxu0 0.0
      %2158 = vmatmul.mubr.f32.gmra.mrb[0].mxu0 %v1948
      %v2159 = vpop.f32.mrb[0].mxu0
      %v2160 = vadd.f32 %v1875, %v2159
      %v2161 = vpop.f32.mrb[0].mxu0
      %2162 = vmatprep.mubr.f32.mxu0 0.0
      %2163 = vmatmul.mubr.f32.gmra.mrb[0].mxu0 %v1951
      %v2164 = vpop.f32.mrb[0].mxu0
      %v2165 = vadd.f32 %v1875, %v2164
      %v2166 = vpop.f32.mrb[0].mxu0
      %2167 = vmatprep.mubr.f32.mxu0 0.0
      %2168 = vmatmul.mubr.f32.gmra.mrb[0].mxu0 %v1954
      %v2169 = vpop.f32.mrb[0].mxu0
      %v2170 = vadd.f32 %v1875, %v2169
      %v2171 = vpop.f32.mrb[0].mxu0
      %2172 = vmatprep.mubr.f32.mxu0 0.0
      %2173 = vmatmul.mubr.f32.gmra.mrb[0].mxu0 %v1957
      %v2174 = vpop.f32.mrb[0].mxu0
      %v2175 = vadd.f32 %v1875, %v2174
      %v2176 = vpop.f32.mrb[0].mxu0
      %2177 = vmatprep.mubr.f32.mxu0 0.0
      %2178 = vmatmul.mubr.f32.gmra.mrb[0].mxu0 %v1960
      %v2179 = vpop.f32.mrb[0].mxu0
      %v2180 = vadd.f32 %v1875, %v2179
      %v2181 = vpop.f32.mrb[0].mxu0
      %2182 = vmatprep.mubr.f32.mxu0 0.0
      %2183 = vmatmul.mubr.f32.gmra.mrb[0].mxu0 %v1963
      %v2184 = vpop.f32.mrb[0].mxu0
      %v2185 = vadd.f32 %v1875, %v2184
      %v2186 = vpop.f32.mrb[0].mxu0
      %2187 = vmatprep.mubr.f32.mxu0 0.0
      %2188 = vmatmul.mubr.f32.gmra.mrb[0].mxu0 %v1966
      %v2189 = vpop.f32.mrb[0].mxu0
      %v2190 = vadd.f32 %v1875, %v2189
      %v2191 = vpop.f32.mrb[0].mxu0
      %2192 = vmatprep.mubr.f32.mxu0 0.0
      %2193 = vmatmul.mubr.f32.gmra.mrb[0].mxu0 %v1969
      %v2194 = vpop.f32.mrb[0].mxu0
      %v2195 = vadd.f32 %v1875, %v2194
      %v2196 = vpop.f32.mrb[0].mxu0
      %2197 = vmatprep.mubr.f32.mxu0 0.0
      %2198 = vmatmul.mubr.f32.gmra.mrb[0].mxu0 %v1972
      %v2199 = vpop.f32.mrb[0].mxu0
      %v2200 = vadd.f32 %v1875, %v2199
      %v2201 = vpop.f32.mrb[0].mxu0
      %2202 = vdwg.mxu0
      %v2203 = vmax.f32 %v2045, 0.0
      %v2204 = vmax.f32 %v2050, 0.0
      %v2205 = vmax.f32 %v2055, 0.0
      %v2206 = vmax.f32 %v2060, 0.0
      %v2207 = vmax.f32 %v2065, 0.0
      %v2208 = vmax.f32 %v2070, 0.0
      %v2209 = vmax.f32 %v2075, 0.0
      %v2210 = vmax.f32 %v2080, 0.0
      %v2211 = vmax.f32 %v2085, 0.0
      %v2212 = vmax.f32 %v2090, 0.0
      %v2213 = vmax.f32 %v2095, 0.0
      %v2214 = vmax.f32 %v2100, 0.0
      %v2215 = vmax.f32 %v2105, 0.0
      %v2216 = vmax.f32 %v2110, 0.0
      %v2217 = vmax.f32 %v2115, 0.0
      %v2218 = vmax.f32 %v2120, 0.0
      %v2219 = vmax.f32 %v2125, 0.0
      %v2220 = vmax.f32 %v2130, 0.0
      %v2221 = vmax.f32 %v2135, 0.0
      %v2222 = vmax.f32 %v2140, 0.0
      %v2223 = vmax.f32 %v2145, 0.0
      %v2224 = vmax.f32 %v2150, 0.0
      %v2225 = vmax.f32 %v2155, 0.0
      %v2226 = vmax.f32 %v2160, 0.0
      %v2227 = vmax.f32 %v2165, 0.0
      %v2228 = vmax.f32 %v2170, 0.0
      %v2229 = vmax.f32 %v2175, 0.0
      %v2230 = vmax.f32 %v2180, 0.0
      %v2231 = vmax.f32 %v2185, 0.0
      %v2232 = vmax.f32 %v2190, 0.0
      %v2233 = vmax.f32 %v2195, 0.0
      %v2234 = vmax.f32 %v2200, 0.0
      %2235 = vst [vmem:[%s197] sm:$0xff] %v2203
      %2236 = vst [vmem:[%s197 + $0x8] sm:$0xff] %v2204
      %2237 = vst [vmem:[%s197 + $0x10] sm:$0xff] %v2205
      %2238 = vst [vmem:[%s197 + $0x18] sm:$0xff] %v2206
      %2239 = vst [vmem:[%s197 + $0x20] sm:$0xff] %v2207
      %2240 = vst [vmem:[%s197 + $0x28] sm:$0xff] %v2208
      %2241 = vst [vmem:[%s197 + $0x30] sm:$0xff] %v2209
      %2242 = vst [vmem:[%s197 + $0x38] sm:$0xff] %v2210
      %2243 = vst [vmem:[%s197 + $0x40] sm:$0xff] %v2211
      %2244 = vst [vmem:[%s197 + $0x48] sm:$0xff] %v2212
      %2245 = vst [vmem:[%s197 + $0x50] sm:$0xff] %v2213
      %2246 = vst [vmem:[%s197 + $0x58] sm:$0xff] %v2214
      %2247 = vst [vmem:[%s197 + $0x60] sm:$0xff] %v2215
      %2248 = vst [vmem:[%s197 + $0x68] sm:$0xff] %v2216
      %2249 = vst [vmem:[%s197 + $0x70] sm:$0xff] %v2217
      %2250 = vst [vmem:[%s197 + $0x78] sm:$0xff] %v2218
      %2251 = vst [vmem:[%s197 + $0x80] sm:$0xff] %v2219
      %2252 = vst [vmem:[%s197 + $0x88] sm:$0xff] %v2220
      %2253 = vst [vmem:[%s197 + $0x90] sm:$0xff] %v2221
      %2254 = vst [vmem:[%s197 + $0x98] sm:$0xff] %v2222
      %2255 = vst [vmem:[%s197 + $0xa0] sm:$0xff] %v2223
      %2256 = vst [vmem:[%s197 + $0xa8] sm:$0xff] %v2224
      %2257 = vst [vmem:[%s197 + $0xb0] sm:$0xff] %v2225
      %2258 = vst [vmem:[%s197 + $0xb8] sm:$0xff] %v2226
      %2259 = vst [vmem:[%s197 + $0xc0] sm:$0xff] %v2227
      %2260 = vst [vmem:[%s197 + $0xc8] sm:$0xff] %v2228
      %2261 = vst [vmem:[%s197 + $0xd0] sm:$0xff] %v2229
      %2262 = vst [vmem:[%s197 + $0xd8] sm:$0xff] %v2230
      %2263 = vst [vmem:[%s197 + $0xe0] sm:$0xff] %v2231
      %2264 = vst [vmem:[%s197 + $0xe8] sm:$0xff] %v2232
      %2265 = vst [vmem:[%s197 + $0xf0] sm:$0xff] %v2233
      %2266 = vst [vmem:[%s197 + $0xf8] sm:$0xff] %v2234
      %p2267 = scmp.lt.s32.totalorder %s15, 1
      %s2268 = scalar_select %p2267, %s15, 1
      %s2269 = smul.addr %s2268, 32
      %s2270 = smul.addr %s2269, 8
      %s2271 = scalar_lea.vmem %s4, %s2270
      // Predicated region
      $region37: #{fire_block.1} parent=35 // pred_check
        %p2272 = pneg %p122
      $region38: #{fire_block.1} parent=35 // pred_check_branch
        %2274 = sbr.rel (%p2272) target = $region40
      $region39: #{fire_block.1} parent=35 // pred_region
        _
      $region40: #{fire_block.1} parent=35 // pred_fallthru
        _
    $region36: #{fire_block.1} parent=5 // pred_fallthru
      _
    %p2275 = scmp.le.s32.totalorder 2, %s10
    // Predicated region
    $region41: #{fire_block.1} parent=5 // pred_check
      %p2276 = pneg %p2275
    $region42: #{fire_block.1} parent=5 // pred_check_branch
      %2278 = sbr.rel (%p2276) target = $region44
    $region43: #{fire_block.1} parent=5 // pred_region
      %s2279 = ssub.s32 %s10, 2
      // Predicated region
      $region45: #{fire_block.1} parent=43 // pred_check
        %p2280 = pneg %p128
      $region46: #{fire_block.1} parent=43 // pred_check_branch
        %2282 = sbr.rel (%p2280) target = $region48
      $region47: #{fire_block.1} parent=43 // pred_region
        %p2283 = scmp.lt.s32.totalorder %s16, 1
        %s2284 = scalar_select %p2283, %s16, 1
        %s2285 = smul.addr %s2284, 32
        %s2286 = smul.addr %s2285, 8
        %s2287 = scalar_lea.vmem %s4, %s2286
      $region48: #{fire_block.1} parent=43 // pred_fallthru
        _
    $region44: #{fire_block.1} parent=5 // pred_fallthru
      _
  $region6: #{fire_block.1} parent=0 // loop_footer
    %s14 = sadd.s32 1, %s10
  $region7: #{fire_block.1} parent=0 // loop_footer_branch
    %9 = sbr.rel target = $region3
  $region8: #{fire_block.1} parent=0 // loop_exit
    _

</llo_original>
